<compile_context>
chip_gen: v7x
topology: tpu7x:2x2x1
jax: 0.10.0
libtpu: 0.0.40
codegen_flags: <defaults>
</compile_context>

<pallas_src>
import jax
import jax.numpy as jnp
from jax.experimental import pallas as pl
from jax.experimental.pallas import tpu as pltpu


# ----------------------------------------------------------------------------
# Plain-JAX glue mirroring the torch helpers (deterministic, no checkpoints).
# ----------------------------------------------------------------------------
def calc_labels(batch_size, numcams):
    numframes = batch_size // numcams
    lbl_dim = numcams * numframes
    idx = jnp.arange(lbl_dim)
    same_cam = (idx[:, None] // numframes) == (idx[None, :] // numframes)
    return same_cam.astype(jnp.float32)


def calc_m(batch_size, numcams, m1, m2):
    lbls = calc_labels(batch_size=batch_size, numcams=numcams)
    return jnp.where(lbls == 1.0, jnp.float32(m1), jnp.float32(m2))


def dft_matrix(n):
    """Real/imag parts of the full NxN DFT matrix F[k, m] = exp(-2*pi*i*k*m/n)."""
    k = jnp.arange(n, dtype=jnp.float32)
    ang = -2.0 * jnp.pi * (k[:, None] * k[None, :]) / jnp.float32(n)
    return jnp.cos(ang), jnp.sin(ang)


def rdft_matrix(n, nh):
    """Real/imag parts of the N x Nh half-plane DFT matrix (rfft columns)."""
    m = jnp.arange(n, dtype=jnp.float32)[:, None]
    k = jnp.arange(nh, dtype=jnp.float32)[None, :]
    ang = -2.0 * jnp.pi * m * k / jnp.float32(n)
    return jnp.cos(ang), jnp.sin(ang)


# ----------------------------------------------------------------------------
# Pallas kernel: half-plane |fft2(x)|^2 accumulated over the batch.
# ----------------------------------------------------------------------------
def _make_psd_kernel(tb, h, wh):
    def kernel(x_ref, fwr_ref, fwi_ref, fhr_ref, fhi_ref, out_ref):
        step = pl.program_id(1)

        @pl.when(step == 0)
        def _init():
            out_ref[...] = jnp.zeros_like(out_ref)

        x = x_ref[...]                 # (TB*H, W), batch stacked along rows
        fwr = fwr_ref[...]             # (W, Wh)
        fwi = fwi_ref[...]             # (W, Wh)
        fhr = fhr_ref[...]             # (H, H)
        fhi = fhi_ref[...]             # (H, H)

        # ---- row rFFT: two stacked matmuls, M = TB*H (real input) ----------
        yr = jnp.dot(x, fwr, preferred_element_type=jnp.float32)   # (TB*H, Wh)
        yi = jnp.dot(x, fwi, preferred_element_type=jnp.float32)   # (TB*H, Wh)

        # ---- column FFT from the left, per batch element --------------------
        # Row slices at multiples of H are sublane-aligned static views; the
        # PSD is accumulated directly in (H, Wh) orientation -> no transposes.
        acc = jnp.zeros((h, wh), dtype=jnp.float32)
        for b in range(tb):
            yrb = yr[b * h:(b + 1) * h, :]
            yib = yi[b * h:(b + 1) * h, :]
            rr = jnp.dot(fhr, yrb, preferred_element_type=jnp.float32)
            ii = jnp.dot(fhi, yib, preferred_element_type=jnp.float32)
            ri = jnp.dot(fhr, yib, preferred_element_type=jnp.float32)
            ir = jnp.dot(fhi, yrb, preferred_element_type=jnp.float32)
            xr = rr - ii               # Re(fft2(x_b)) on the half-plane
            xi = ri + ir               # Im(fft2(x_b)) on the half-plane
            acc = acc + xr * xr + xi * xi

        out_ref[...] += acc[None, :, :]

    return kernel


def _live_bytes(tb, h, w, wh):
    """Rough per-step VMEM footprint in bytes (f32) including double buffers."""
    return 4 * (2 * tb * h * w          # input block (double-buffered)
                + 2 * tb * h * wh       # yr, yi
                + 12 * h * wh           # per-batch temporaries + partial PSD
                + 4 * (w * wh + h * h)) # twiddles (double-buffered, real+imag)


def _pick_batch_block(bp, h, w, wh, budget_bytes, max_tb=32):
    """Largest TB with TB | bp, a legal (TB*H, W) block, within the budget."""
    best = 1
    for tb in range(1, min(bp, max_tb) + 1):
        if bp % tb != 0:
            continue
        if (tb * h) % 8 != 0:
            continue
        if _live_bytes(tb, h, w, wh) <= budget_bytes:
            best = tb
    return best


def calc_psd_pallas(xs):
    """xs: (B, H, W) float32 -> scalar float32 (r = mean(log psd) - log(mean psd))."""
    b, h, w = xs.shape
    wh = w // 2 + 1

    fhr, fhi = dft_matrix(h)            # (H, H)
    fwr, fwi = rdft_matrix(w, wh)       # (W, Wh)

    budget = 24 * 1024 * 1024
    if h % 8 == 0:
        n_par = 2 if (b % 2 == 0 and b >= 2) else 1
        bp = b // n_par
        tb = _pick_batch_block(bp, h, w, wh, budget)
    else:
        # Fall back to a single full-array block so the (8,128) rule is met.
        n_par, bp, tb = 1, b, b
    nsteps = bp // tb

    x_rows = xs.reshape(b * h, w).astype(jnp.float32)   # batch stacked on rows
    kernel = _make_psd_kernel(tb=tb, h=h, wh=wh)

    est = _live_bytes(tb, h, w, wh)
    vmem_limit = int(min(max(2 * est, 32 * 1024 * 1024), 48 * 1024 * 1024))

    partial = pl.pallas_call(
        kernel,
        out_shape=jax.ShapeDtypeStruct((n_par, h, wh), jnp.float32),
        grid_spec=pltpu.PrefetchScalarGridSpec(
            num_scalar_prefetch=0,
            grid=(n_par, nsteps),
            in_specs=[
                pl.BlockSpec((tb * h, w), lambda p, s: (p * nsteps + s, 0)),
                pl.BlockSpec((w, wh), lambda p, s: (0, 0)),
                pl.BlockSpec((w, wh), lambda p, s: (0, 0)),
                pl.BlockSpec((h, h), lambda p, s: (0, 0)),
                pl.BlockSpec((h, h), lambda p, s: (0, 0)),
            ],
            out_specs=pl.BlockSpec((1, h, wh), lambda p, s: (p, 0, 0)),
        ),
        compiler_params=pltpu.CompilerParams(
            dimension_semantics=("parallel", "arbitrary"),
            vmem_limit_bytes=vmem_limit),
    )(x_rows, fwr, fwi, fhr, fhi)

    # --- tiny epilogue outside the kernel --------------------------------
    # partial: (n_par, H, Wh) partial sums of |X|^2 over the batch, half-plane.
    psd_sum = jnp.sum(partial, axis=0)                      # (H, Wh)
    col = jnp.arange(wh)
    if w % 2 == 0:
        col_w = jnp.where((col == 0) | (col == wh - 1), 1.0, 2.0)
    else:
        col_w = jnp.where(col == 0, 1.0, 2.0)
    col_w = col_w.astype(jnp.float32)[None, :]
    denom = jnp.float32(h * w)
    # 1/B scaling is dropped: it cancels in mean(log p) - log(mean p).
    mean_log = jnp.sum(jnp.log(psd_sum) * col_w) / denom
    mean_p = jnp.sum(psd_sum * col_w) / denom
    return mean_log - jnp.log(mean_p)


# ----------------------------------------------------------------------------
# Module equivalent.
# ----------------------------------------------------------------------------
class OneClassBCE:
    def __init__(self, batch_size, num_cam, reg, m1, m2):
        self.reg = jnp.float32(reg)
        # Deterministic "parameters" from __init__ (kept for fidelity with the
        # torch module; not used by the implemented part of forward).
        self.m = calc_m(batch_size=batch_size, numcams=num_cam, m1=m1, m2=m2)
        self.label = calc_labels(batch_size=batch_size, numcams=num_cam)

    def __call__(self, x):
        xs = x[:, 0]                       # (B, 1, H, W) -> (B, H, W); safe for B == 1
        l2 = self.reg * calc_psd_pallas(xs)
        # TODO(synk): loss2.SoftMLoss has no provided source; using l3 = 0.0.
        l3 = jnp.float32(0.0)
        return l3 - l2


# ----------------------------------------------------------------------------
if __name__ == "__main__":
    B, H, W = 8, 16, 16
    num_cam, reg, m1, m2 = 2, 0.1, 0.9, 0.1

    key = jax.random.PRNGKey(0)
    x = jax.random.normal(key, (B, 1, H, W), dtype=jnp.float32)

    loss_fn = OneClassBCE(batch_size=B, num_cam=num_cam, reg=reg, m1=m1, m2=m2)
    out = jax.block_until_ready(loss_fn(x))

    # Reference check of the Pallas PSD path against jnp.fft.fft2.
    xs = x[:, 0]
    dft = jnp.fft.fft2(xs)
    avgpsd = jnp.mean((dft * jnp.conj(dft)).real, axis=0)
    r_ref = jnp.mean(jnp.log(avgpsd)) - jnp.log(jnp.mean(avgpsd))
    expected = 0.0 - reg * r_ref
    assert abs(float(out) - float(expected)) < 5e-3, (float(out), float(expected))

    print("KERNEL_OK")
</pallas_src>

<mosaic_0001>
module attributes {stable_mosaic.version = 11 : i64} {
  func.func @kernel(%arg0: i32, %arg1: i32, %arg2: memref<64x16xf32, #tpu.memory_space<vmem>>, %arg3: memref<16x9xf32, #tpu.memory_space<vmem>>, %arg4: memref<16x9xf32, #tpu.memory_space<vmem>>, %arg5: memref<16x16xf32, #tpu.memory_space<vmem>>, %arg6: memref<16x16xf32, #tpu.memory_space<vmem>>, %arg7: memref<1x16x9xf32, #tpu.memory_space<vmem>>) attributes {dimension_semantics = [#tpu.dimension_semantics<parallel>, #tpu.dimension_semantics<arbitrary>], iteration_bounds = array<i64: 2, 1>, scalar_prefetch = 0 : i64, scratch_operands = 0 : i64, tpu.core_type = #tpu.core_type<tc>, window_params = [{transform_indices = @transform_0, window_bounds = array<i64: 64, 16>}, {pipeline_mode = #tpu.pipeline_mode<synchronous>, transform_indices = @transform_1, window_bounds = array<i64: 16, 9>}, {pipeline_mode = #tpu.pipeline_mode<synchronous>, transform_indices = @transform_2, window_bounds = array<i64: 16, 9>}, {pipeline_mode = #tpu.pipeline_mode<synchronous>, transform_indices = @transform_3, window_bounds = array<i64: 16, 16>}, {pipeline_mode = #tpu.pipeline_mode<synchronous>, transform_indices = @transform_4, window_bounds = array<i64: 16, 16>}, {transform_indices = @transform_5, window_bounds = array<i64: 1, 16, 9>}]} {
    %c0_i32 = arith.constant 0 : i32
    %0 = arith.cmpi eq, %arg1, %c0_i32 : i32
    %1 = arith.extui %0 : i1 to i32
    %c0_i32_0 = arith.constant 0 : i32
    %2 = arith.cmpi ne, %1, %c0_i32_0 : i32
    scf.if %2 {
      %cst_34 = arith.constant 0.000000e+00 : f32
      %63 = vector.broadcast %cst_34 : f32 to vector<1x16x9xf32>
      %c0_35 = arith.constant 0 : index
      %c0_36 = arith.constant 0 : index
      %c0_37 = arith.constant 0 : index
      %64 = vector.load %arg7[%c0_35, %c0_36, %c0_37] : memref<1x16x9xf32, #tpu.memory_space<vmem>>, vector<1x16x9xf32>
      tpu.vector_store %arg7[%c0_35, %c0_36, %c0_37], %63 {strides = array<i32>} : memref<1x16x9xf32, #tpu.memory_space<vmem>>, vector<1x16x9xf32>,
    } else {
    }
    %c0 = arith.constant 0 : index
    %c0_1 = arith.constant 0 : index
    %3 = vector.load %arg2[%c0, %c0_1] : memref<64x16xf32, #tpu.memory_space<vmem>>, vector<64x16xf32>
    %c0_2 = arith.constant 0 : index
    %c0_3 = arith.constant 0 : index
    %4 = vector.load %arg3[%c0_2, %c0_3] : memref<16x9xf32, #tpu.memory_space<vmem>>, vector<16x9xf32>
    %c0_4 = arith.constant 0 : index
    %c0_5 = arith.constant 0 : index
    %5 = vector.load %arg4[%c0_4, %c0_5] : memref<16x9xf32, #tpu.memory_space<vmem>>, vector<16x9xf32>
    %c0_6 = arith.constant 0 : index
    %c0_7 = arith.constant 0 : index
    %6 = vector.load %arg5[%c0_6, %c0_7] : memref<16x16xf32, #tpu.memory_space<vmem>>, vector<16x16xf32>
    %c0_8 = arith.constant 0 : index
    %c0_9 = arith.constant 0 : index
    %7 = vector.load %arg6[%c0_8, %c0_9] : memref<16x16xf32, #tpu.memory_space<vmem>>, vector<16x16xf32>
    %cst = arith.constant dense<0.000000e+00> : vector<64x9xf32>
    %8 = tpu.matmul %3, %4, %cst {dimension_numbers = #tpu.dot_dimension_numbers<[1], [0], [0], [1], [0, 0, 1, 1], [], []>} : vector<64x16xf32>, vector<16x9xf32>, vector<64x9xf32> -> vector<64x9xf32>
    %cst_10 = arith.constant dense<0.000000e+00> : vector<64x9xf32>
    %9 = tpu.matmul %3, %5, %cst_10 {dimension_numbers = #tpu.dot_dimension_numbers<[1], [0], [0], [1], [0, 0, 1, 1], [], []>} : vector<64x16xf32>, vector<16x9xf32>, vector<64x9xf32> -> vector<64x9xf32>
    %cst_11 = arith.constant 0.000000e+00 : f32
    %10 = vector.broadcast %cst_11 : f32 to vector<16x9xf32>
    %11 = vector.extract_strided_slice %8 {offsets = [0, 0], sizes = [16, 9], strides = [1, 1]} : vector<64x9xf32> to vector<16x9xf32>
    %12 = vector.extract_strided_slice %9 {offsets = [0, 0], sizes = [16, 9], strides = [1, 1]} : vector<64x9xf32> to vector<16x9xf32>
    %cst_12 = arith.constant dense<0.000000e+00> : vector<16x9xf32>
    %13 = tpu.matmul %6, %11, %cst_12 {dimension_numbers = #tpu.dot_dimension_numbers<[1], [0], [0], [1], [0, 0, 1, 1], [], []>} : vector<16x16xf32>, vector<16x9xf32>, vector<16x9xf32> -> vector<16x9xf32>
    %cst_13 = arith.constant dense<0.000000e+00> : vector<16x9xf32>
    %14 = tpu.matmul %7, %12, %cst_13 {dimension_numbers = #tpu.dot_dimension_numbers<[1], [0], [0], [1], [0, 0, 1, 1], [], []>} : vector<16x16xf32>, vector<16x9xf32>, vector<16x9xf32> -> vector<16x9xf32>
    %cst_14 = arith.constant dense<0.000000e+00> : vector<16x9xf32>
    %15 = tpu.matmul %6, %12, %cst_14 {dimension_numbers = #tpu.dot_dimension_numbers<[1], [0], [0], [1], [0, 0, 1, 1], [], []>} : vector<16x16xf32>, vector<16x9xf32>, vector<16x9xf32> -> vector<16x9xf32>
    %cst_15 = arith.constant dense<0.000000e+00> : vector<16x9xf32>
    %16 = tpu.matmul %7, %11, %cst_15 {dimension_numbers = #tpu.dot_dimension_numbers<[1], [0], [0], [1], [0, 0, 1, 1], [], []>} : vector<16x16xf32>, vector<16x9xf32>, vector<16x9xf32> -> vector<16x9xf32>
    %17 = arith.subf %13, %14 : vector<16x9xf32>
    %18 = arith.addf %15, %16 : vector<16x9xf32>
    %19 = arith.mulf %17, %17 : vector<16x9xf32>
    %20 = arith.addf %10, %19 : vector<16x9xf32>
    %21 = arith.mulf %18, %18 : vector<16x9xf32>
    %22 = arith.addf %20, %21 : vector<16x9xf32>
    %23 = vector.extract_strided_slice %8 {offsets = [16, 0], sizes = [16, 9], strides = [1, 1]} : vector<64x9xf32> to vector<16x9xf32>
    %24 = vector.extract_strided_slice %9 {offsets = [16, 0], sizes = [16, 9], strides = [1, 1]} : vector<64x9xf32> to vector<16x9xf32>
    %cst_16 = arith.constant dense<0.000000e+00> : vector<16x9xf32>
    %25 = tpu.matmul %6, %23, %cst_16 {dimension_numbers = #tpu.dot_dimension_numbers<[1], [0], [0], [1], [0, 0, 1, 1], [], []>} : vector<16x16xf32>, vector<16x9xf32>, vector<16x9xf32> -> vector<16x9xf32>
    %cst_17 = arith.constant dense<0.000000e+00> : vector<16x9xf32>
    %26 = tpu.matmul %7, %24, %cst_17 {dimension_numbers = #tpu.dot_dimension_numbers<[1], [0], [0], [1], [0, 0, 1, 1], [], []>} : vector<16x16xf32>, vector<16x9xf32>, vector<16x9xf32> -> vector<16x9xf32>
    %cst_18 = arith.constant dense<0.000000e+00> : vector<16x9xf32>
    %27 = tpu.matmul %6, %24, %cst_18 {dimension_numbers = #tpu.dot_dimension_numbers<[1], [0], [0], [1], [0, 0, 1, 1], [], []>} : vector<16x16xf32>, vector<16x9xf32>, vector<16x9xf32> -> vector<16x9xf32>
    %cst_19 = arith.constant dense<0.000000e+00> : vector<16x9xf32>
    %28 = tpu.matmul %7, %23, %cst_19 {dimension_numbers = #tpu.dot_dimension_numbers<[1], [0], [0], [1], [0, 0, 1, 1], [], []>} : vector<16x16xf32>, vector<16x9xf32>, vector<16x9xf32> -> vector<16x9xf32>
    %29 = arith.subf %25, %26 : vector<16x9xf32>
    %30 = arith.addf %27, %28 : vector<16x9xf32>
    %31 = arith.mulf %29, %29 : vector<16x9xf32>
    %32 = arith.addf %22, %31 : vector<16x9xf32>
    %33 = arith.mulf %30, %30 : vector<16x9xf32>
    %34 = arith.addf %32, %33 : vector<16x9xf32>
    %35 = vector.extract_strided_slice %8 {offsets = [32, 0], sizes = [16, 9], strides = [1, 1]} : vector<64x9xf32> to vector<16x9xf32>
    %36 = vector.extract_strided_slice %9 {offsets = [32, 0], sizes = [16, 9], strides = [1, 1]} : vector<64x9xf32> to vector<16x9xf32>
    %cst_20 = arith.constant dense<0.000000e+00> : vector<16x9xf32>
    %37 = tpu.matmul %6, %35, %cst_20 {dimension_numbers = #tpu.dot_dimension_numbers<[1], [0], [0], [1], [0, 0, 1, 1], [], []>} : vector<16x16xf32>, vector<16x9xf32>, vector<16x9xf32> -> vector<16x9xf32>
    %cst_21 = arith.constant dense<0.000000e+00> : vector<16x9xf32>
    %38 = tpu.matmul %7, %36, %cst_21 {dimension_numbers = #tpu.dot_dimension_numbers<[1], [0], [0], [1], [0, 0, 1, 1], [], []>} : vector<16x16xf32>, vector<16x9xf32>, vector<16x9xf32> -> vector<16x9xf32>
    %cst_22 = arith.constant dense<0.000000e+00> : vector<16x9xf32>
    %39 = tpu.matmul %6, %36, %cst_22 {dimension_numbers = #tpu.dot_dimension_numbers<[1], [0], [0], [1], [0, 0, 1, 1], [], []>} : vector<16x16xf32>, vector<16x9xf32>, vector<16x9xf32> -> vector<16x9xf32>
    %cst_23 = arith.constant dense<0.000000e+00> : vector<16x9xf32>
    %40 = tpu.matmul %7, %35, %cst_23 {dimension_numbers = #tpu.dot_dimension_numbers<[1], [0], [0], [1], [0, 0, 1, 1], [], []>} : vector<16x16xf32>, vector<16x9xf32>, vector<16x9xf32> -> vector<16x9xf32>
    %41 = arith.subf %37, %38 : vector<16x9xf32>
    %42 = arith.addf %39, %40 : vector<16x9xf32>
    %43 = arith.mulf %41, %41 : vector<16x9xf32>
    %44 = arith.addf %34, %43 : vector<16x9xf32>
    %45 = arith.mulf %42, %42 : vector<16x9xf32>
    %46 = arith.addf %44, %45 : vector<16x9xf32>
    %47 = vector.extract_strided_slice %8 {offsets = [48, 0], sizes = [16, 9], strides = [1, 1]} : vector<64x9xf32> to vector<16x9xf32>
    %48 = vector.extract_strided_slice %9 {offsets = [48, 0], sizes = [16, 9], strides = [1, 1]} : vector<64x9xf32> to vector<16x9xf32>
    %cst_24 = arith.constant dense<0.000000e+00> : vector<16x9xf32>
    %49 = tpu.matmul %6, %47, %cst_24 {dimension_numbers = #tpu.dot_dimension_numbers<[1], [0], [0], [1], [0, 0, 1, 1], [], []>} : vector<16x16xf32>, vector<16x9xf32>, vector<16x9xf32> -> vector<16x9xf32>
    %cst_25 = arith.constant dense<0.000000e+00> : vector<16x9xf32>
    %50 = tpu.matmul %7, %48, %cst_25 {dimension_numbers = #tpu.dot_dimension_numbers<[1], [0], [0], [1], [0, 0, 1, 1], [], []>} : vector<16x16xf32>, vector<16x9xf32>, vector<16x9xf32> -> vector<16x9xf32>
    %cst_26 = arith.constant dense<0.000000e+00> : vector<16x9xf32>
    %51 = tpu.matmul %6, %48, %cst_26 {dimension_numbers = #tpu.dot_dimension_numbers<[1], [0], [0], [1], [0, 0, 1, 1], [], []>} : vector<16x16xf32>, vector<16x9xf32>, vector<16x9xf32> -> vector<16x9xf32>
    %cst_27 = arith.constant dense<0.000000e+00> : vector<16x9xf32>
    %52 = tpu.matmul %7, %47, %cst_27 {dimension_numbers = #tpu.dot_dimension_numbers<[1], [0], [0], [1], [0, 0, 1, 1], [], []>} : vector<16x16xf32>, vector<16x9xf32>, vector<16x9xf32> -> vector<16x9xf32>
    %53 = arith.subf %49, %50 : vector<16x9xf32>
    %54 = arith.addf %51, %52 : vector<16x9xf32>
    %55 = arith.mulf %53, %53 : vector<16x9xf32>
    %56 = arith.addf %46, %55 : vector<16x9xf32>
    %57 = arith.mulf %54, %54 : vector<16x9xf32>
    %58 = arith.addf %56, %57 : vector<16x9xf32>
    %c0_28 = arith.constant 0 : index
    %c0_29 = arith.constant 0 : index
    %c0_30 = arith.constant 0 : index
    %59 = vector.load %arg7[%c0_28, %c0_29, %c0_30] : memref<1x16x9xf32, #tpu.memory_space<vmem>>, vector<1x16x9xf32>
    %60 = vector.shape_cast %58 : vector<16x9xf32> to vector<1x16x9xf32>
    %61 = arith.addf %59, %60 : vector<1x16x9xf32>
    %c0_31 = arith.constant 0 : index
    %c0_32 = arith.constant 0 : index
    %c0_33 = arith.constant 0 : index
    %62 = vector.load %arg7[%c0_31, %c0_32, %c0_33] : memref<1x16x9xf32, #tpu.memory_space<vmem>>, vector<1x16x9xf32>
    tpu.vector_store %arg7[%c0_31, %c0_32, %c0_33], %61 {strides = array<i32>} : memref<1x16x9xf32, #tpu.memory_space<vmem>>, vector<1x16x9xf32>,
    return
  }
  func.func @transform_0(%arg0: i32, %arg1: i32) -> (i32, i32) {
    %c1_i32 = arith.constant 1 : i32
    %0 = arith.muli %arg0, %c1_i32 : i32
    %1 = arith.addi %0, %arg1 : i32
    %c0_i32 = arith.constant 0 : i32
    %c0_i32_0 = arith.constant 0 : i32
    return %1, %c0_i32 : i32, i32
  }
  func.func @transform_1(%arg0: i32, %arg1: i32) -> (i32, i32) {
    %c0_i32 = arith.constant 0 : i32
    %c0_i32_0 = arith.constant 0 : i32
    %c0_i32_1 = arith.constant 0 : i32
    return %c0_i32, %c0_i32_0 : i32, i32
  }
  func.func @transform_2(%arg0: i32, %arg1: i32) -> (i32, i32) {
    %c0_i32 = arith.constant 0 : i32
    %c0_i32_0 = arith.constant 0 : i32
    %c0_i32_1 = arith.constant 0 : i32
    return %c0_i32, %c0_i32_0 : i32, i32
  }
  func.func @transform_3(%arg0: i32, %arg1: i32) -> (i32, i32) {
    %c0_i32 = arith.constant 0 : i32
    %c0_i32_0 = arith.constant 0 : i32
    %c0_i32_1 = arith.constant 0 : i32
    return %c0_i32, %c0_i32_0 : i32, i32
  }
  func.func @transform_4(%arg0: i32, %arg1: i32) -> (i32, i32) {
    %c0_i32 = arith.constant 0 : i32
    %c0_i32_0 = arith.constant 0 : i32
    %c0_i32_1 = arith.constant 0 : i32
    return %c0_i32, %c0_i32_0 : i32, i32
  }
  func.func @transform_5(%arg0: i32, %arg1: i32) -> (i32, i32, i32) {
    %c0_i32 = arith.constant 0 : i32
    %c0_i32_0 = arith.constant 0 : i32
    %c0_i32_1 = arith.constant 0 : i32
    return %arg0, %c0_i32, %c0_i32_0 : i32, i32, i32
  }
}

</mosaic_0001>

<llo_original>
// kernel: tpu_custom_call.1
$region0: #{tpu_custom_call.1}
  #allocation0 [shape = 'u32[]', space=smem, size = 0x4, offset = 0x4, fixed_abs, tag = 'smem constant byte address 0x4 - core index']
  #allocation1 [shape = 'u32[144,128]{1,0:T(1,128)}', space=vmem, size = 0x12000, scoped, tag = 'internal scratch']
  %s0 = inlined_call_operand.vmem [shape: f32[128,16], index: 0, kind: input, shape index: {}]
  %s1 = inlined_call_operand.vmem [shape: f32[16,9], index: 1, kind: input, shape index: {}]
  %s2 = inlined_call_operand.vmem [shape: f32[16,9], index: 2, kind: input, shape index: {}]
  %s3 = inlined_call_operand.vmem [shape: f32[16,16], index: 3, kind: input, shape index: {}]
  %s4 = inlined_call_operand.vmem [shape: f32[16,16], index: 4, kind: input, shape index: {}]
  %s5 = inlined_call_operand.vmem [shape: f32[2,16,9], index: 5, kind: output, shape index: {}]
  %s6 = sld [smem:[#allocation0]]
  $region57: #{tpu_custom_call.1} parent=0
    _
  %s8 = ssub.s32 1, %s6
  %s9 = scalar_select 0, %s8, %s6
  loop: start=0, step=1, limit=4
  $region2: #{tpu_custom_call.1} parent=0 // loop_pre_header
    _
  $region3: #{tpu_custom_call.1} parent=0 // loop_header
    %s11 = sphi 0, %s15
    %p12 = scmp.ge.s32.totalorder %s11, 4
    %s18 = sphi 0, %s30
    %s19 = sphi 0, %s26
    %s20 = sphi 0, %s18
    %s21 = sphi 0, %s19
    %s22 = sphi 0, %s20
    %s23 = sphi 0, %s21
    %s35 = sphi 0, %s37
    %s38 = sphi 0, %s35
    %s39 = sphi 0, %s38
    %s55 = sphi 0, %s39
    %s59 = sphi 0, %s59
    %s61 = sphi 0, %s59
    %s62 = sphi 0, %s61
    %s76 = sphi 0, %s62
    %s80 = sphi 0, %s80
    %s82 = sphi 0, %s80
    %s83 = sphi 0, %s82
    %s97 = sphi 0, %s83
    %s101 = sphi 0, %s101
    %s103 = sphi 0, %s101
    %s104 = sphi 0, %s103
    %s118 = sphi 0, %s104
    %s122 = sphi 0, %s122
    %s124 = sphi 0, %s122
    %s125 = sphi 0, %s124
    %s139 = sphi 0, %s125
    %s145 = sphi 0, %s147
    %s148 = sphi 0, %s145
    %s149 = sphi 0, %s148
    %s165 = sphi 0, %s149
  $region4: #{tpu_custom_call.1} parent=0 // loop_header_branch
    %14 = sbr.rel (%p12) target = $region8
  $region5: #{tpu_custom_call.1} parent=0 // loop_body
    %s16 = ssub.s32 %s11, 1
    %s17 = ssub.s32 %s11, 2
    %s24 = sadd.s32 1, %s19
    %p25 = scmp.ge.s32.totalorder %s24, 1
    %s26 = scalar_select %p25, 0, %s24
    %s27 = sadd.s32 1, %s18
    %s28 = scalar_select %p25, %s27, %s18
    %p29 = scmp.ge.s32.totalorder %s28, 2
    %s30 = scalar_select %p29, 0, %s28
    %s31 = sadd.s32 %s18, %s19
    %s32 = sadd.s32 %s30, %s26
    %s33 = ssub.s32 %s31, %s32
    %p34 = scmp.eq.s32.totalorder %s33, 0
    %s36 = sadd.s32 %s35, 1
    %s37 = scalar_select %p34, %s35, %s36
    %p40 = pneg %p34
    %p41 = scmp.eq.s32.totalorder %s11, 1
    %p42 = por %p40, %p41
    %p43 = scmp.ne.s32.totalorder %s35, %s38
    %p44 = scmp.eq.s32.totalorder %s11, 0
    %p45 = por %p43, %p44
    %p46 = scmp.ne.s32.totalorder %s35, %s38
    %p47 = scmp.eq.s32.totalorder %s16, 1
    %p48 = por %p46, %p47
    %p49 = scmp.ne.s32.totalorder %s38, %s39
    %p50 = scmp.eq.s32.totalorder %s16, 0
    %p51 = por %p49, %p50
    %p52 = scmp.ne.s32.totalorder %s38, %s39
    %p53 = scmp.eq.s32.totalorder %s17, 1
    %p54 = por %p52, %p53
    %p56 = scmp.ne.s32.totalorder %s39, %s55
    %p57 = scmp.eq.s32.totalorder %s17, 0
    %p58 = por %p56, %p57
    %s60 = sadd.s32 %s59, 1
    %p63 = scmp.eq.s32.totalorder %s11, 1
    %p64 = scmp.ne.s32.totalorder %s59, %s61
    %p65 = scmp.eq.s32.totalorder %s11, 0
    %p66 = por %p64, %p65
    %p67 = scmp.ne.s32.totalorder %s59, %s61
    %p68 = scmp.eq.s32.totalorder %s16, 1
    %p69 = por %p67, %p68
    %p70 = scmp.ne.s32.totalorder %s61, %s62
    %p71 = scmp.eq.s32.totalorder %s16, 0
    %p72 = por %p70, %p71
    %p73 = scmp.ne.s32.totalorder %s61, %s62
    %p74 = scmp.eq.s32.totalorder %s17, 1
    %p75 = por %p73, %p74
    %p77 = scmp.ne.s32.totalorder %s62, %s76
    %p78 = scmp.eq.s32.totalorder %s17, 0
    %p79 = por %p77, %p78
    %s81 = sadd.s32 %s80, 1
    %p84 = scmp.eq.s32.totalorder %s11, 1
    %p85 = scmp.ne.s32.totalorder %s80, %s82
    %p86 = scmp.eq.s32.totalorder %s11, 0
    %p87 = por %p85, %p86
    %p88 = scmp.ne.s32.totalorder %s80, %s82
    %p89 = scmp.eq.s32.totalorder %s16, 1
    %p90 = por %p88, %p89
    %p91 = scmp.ne.s32.totalorder %s82, %s83
    %p92 = scmp.eq.s32.totalorder %s16, 0
    %p93 = por %p91, %p92
    %p94 = scmp.ne.s32.totalorder %s82, %s83
    %p95 = scmp.eq.s32.totalorder %s17, 1
    %p96 = por %p94, %p95
    %p98 = scmp.ne.s32.totalorder %s83, %s97
    %p99 = scmp.eq.s32.totalorder %s17, 0
    %p100 = por %p98, %p99
    %s102 = sadd.s32 %s101, 1
    %p105 = scmp.eq.s32.totalorder %s11, 1
    %p106 = scmp.ne.s32.totalorder %s101, %s103
    %p107 = scmp.eq.s32.totalorder %s11, 0
    %p108 = por %p106, %p107
    %p109 = scmp.ne.s32.totalorder %s101, %s103
    %p110 = scmp.eq.s32.totalorder %s16, 1
    %p111 = por %p109, %p110
    %p112 = scmp.ne.s32.totalorder %s103, %s104
    %p113 = scmp.eq.s32.totalorder %s16, 0
    %p114 = por %p112, %p113
    %p115 = scmp.ne.s32.totalorder %s103, %s104
    %p116 = scmp.eq.s32.totalorder %s17, 1
    %p117 = por %p115, %p116
    %p119 = scmp.ne.s32.totalorder %s104, %s118
    %p120 = scmp.eq.s32.totalorder %s17, 0
    %p121 = por %p119, %p120
    %s123 = sadd.s32 %s122, 1
    %p126 = scmp.eq.s32.totalorder %s11, 1
    %p127 = scmp.ne.s32.totalorder %s122, %s124
    %p128 = scmp.eq.s32.totalorder %s11, 0
    %p129 = por %p127, %p128
    %p130 = scmp.ne.s32.totalorder %s122, %s124
    %p131 = scmp.eq.s32.totalorder %s16, 1
    %p132 = por %p130, %p131
    %p133 = scmp.ne.s32.totalorder %s124, %s125
    %p134 = scmp.eq.s32.totalorder %s16, 0
    %p135 = por %p133, %p134
    %p136 = scmp.ne.s32.totalorder %s124, %s125
    %p137 = scmp.eq.s32.totalorder %s17, 1
    %p138 = por %p136, %p137
    %p140 = scmp.ne.s32.totalorder %s125, %s139
    %p141 = scmp.eq.s32.totalorder %s17, 0
    %p142 = por %p140, %p141
    %s143 = ssub.s32 %s18, %s30
    %p144 = scmp.eq.s32.totalorder %s143, 0
    %s146 = sadd.s32 %s145, 1
    %s147 = scalar_select %p144, %s145, %s146
    %p150 = pneg %p144
    %p151 = scmp.eq.s32.totalorder %s11, 1
    %p152 = por %p150, %p151
    %p153 = scmp.ne.s32.totalorder %s145, %s148
    %p154 = scmp.eq.s32.totalorder %s11, 0
    %p155 = por %p153, %p154
    %p156 = scmp.ne.s32.totalorder %s145, %s148
    %p157 = scmp.eq.s32.totalorder %s16, 1
    %p158 = por %p156, %p157
    %p159 = scmp.ne.s32.totalorder %s148, %s149
    %p160 = scmp.eq.s32.totalorder %s16, 0
    %p161 = por %p159, %p160
    %p162 = scmp.ne.s32.totalorder %s148, %s149
    %p163 = scmp.eq.s32.totalorder %s17, 1
    %p164 = por %p162, %p163
    %p166 = scmp.ne.s32.totalorder %s149, %s165
    %p167 = scmp.eq.s32.totalorder %s17, 0
    %p168 = por %p166, %p167
    %p169 = scmp.le.s32.totalorder 1, %s11
    %p170 = scmp.lt.s32.totalorder %s11, 3
    %p171 = pnand %p169, %p170
    %p172 = pneg %p171
    // Predicated region
    $region9: #{tpu_custom_call.1} parent=5 // pred_check
      _
    $region10: #{tpu_custom_call.1} parent=5 // pred_check_branch
      %174 = sbr.rel (%p171) target = $region12
    $region11: #{tpu_custom_call.1} parent=5 // pred_region
      %s175 = ssub.s32 %s11, 1
      // Predicated region
      $region13: #{tpu_custom_call.1} parent=11 // pred_check
        %p176 = pneg %p72
      $region14: #{tpu_custom_call.1} parent=11 // pred_check_branch
        %178 = sbr.rel (%p176) target = $region16
      $region15: #{tpu_custom_call.1} parent=11 // pred_region
        _
      $region16: #{tpu_custom_call.1} parent=11 // pred_fallthru
        _
      // Predicated region
      $region17: #{tpu_custom_call.1} parent=11 // pred_check
        %p179 = pneg %p93
      $region18: #{tpu_custom_call.1} parent=11 // pred_check_branch
        %181 = sbr.rel (%p179) target = $region20
      $region19: #{tpu_custom_call.1} parent=11 // pred_region
        _
      $region20: #{tpu_custom_call.1} parent=11 // pred_fallthru
        _
      // Predicated region
      $region21: #{tpu_custom_call.1} parent=11 // pred_check
        %p182 = pneg %p114
      $region22: #{tpu_custom_call.1} parent=11 // pred_check_branch
        %184 = sbr.rel (%p182) target = $region24
      $region23: #{tpu_custom_call.1} parent=11 // pred_region
        _
      $region24: #{tpu_custom_call.1} parent=11 // pred_fallthru
        _
      // Predicated region
      $region25: #{tpu_custom_call.1} parent=11 // pred_check
        %p185 = pneg %p135
      $region26: #{tpu_custom_call.1} parent=11 // pred_check_branch
        %187 = sbr.rel (%p185) target = $region28
      $region27: #{tpu_custom_call.1} parent=11 // pred_region
        _
      $region28: #{tpu_custom_call.1} parent=11 // pred_fallthru
        _
    $region12: #{tpu_custom_call.1} parent=5 // pred_fallthru
      _
    %p188 = scmp.lt.s32.totalorder %s11, 2
    // Predicated region
    $region29: #{tpu_custom_call.1} parent=5 // pred_check
      %p189 = pneg %p188
    $region30: #{tpu_custom_call.1} parent=5 // pred_check_branch
      %191 = sbr.rel (%p189) target = $region32
    $region31: #{tpu_custom_call.1} parent=5 // pred_region
      // Predicated region
      $region33: #{tpu_custom_call.1} parent=31 // pred_check
        %p192 = pneg %p45
      $region34: #{tpu_custom_call.1} parent=31 // pred_check_branch
        %194 = sbr.rel (%p192) target = $region36
      $region35: #{tpu_custom_call.1} parent=31 // pred_region
        %s195 = sadd.s32 %s18, %s19
        %s196 = smul.u32 8, %s195
        %p197 = scmp.lt.s32.totalorder %s196, 15
        %s198 = scalar_select %p197, %s196, 15
        %s199 = smul.addr %s198, 8
        %s200 = scalar_lea.vmem %s0, %s199
        %s201 = sadd.s32 %s18, %s19
        %s202 = smul.u32 8, %s201
      $region36: #{tpu_custom_call.1} parent=31 // pred_fallthru
        _
    $region32: #{tpu_custom_call.1} parent=5 // pred_fallthru
      _
    %p203 = scmp.le.s32.totalorder 1, %s11
    %p204 = scmp.lt.s32.totalorder %s11, 3
    %p205 = pnand %p203, %p204
    %p206 = pneg %p205
    // Predicated region
    $region37: #{tpu_custom_call.1} parent=5 // pred_check
      _
    $region38: #{tpu_custom_call.1} parent=5 // pred_check_branch
      %208 = sbr.rel (%p205) target = $region40
    $region39: #{tpu_custom_call.1} parent=5 // pred_region
      %s209 = ssub.s32 %s11, 1
      %s210 = sadd.s32 %s20, %s21
      %s211 = smul.u32 8, %s210
      %p212 = scmp.lt.s32.totalorder %s211, 15
      %s213 = scalar_select %p212, %s211, 15
      %s214 = smul.addr %s213, 8
      %s215 = scalar_lea.vmem %s0, %s214
      %p216 = pneg %p51
      %p217 = pneg %p48
      %p218 = pneg %p72
      %p219 = pneg %p69
      %p220 = pneg %p93
      %p221 = pneg %p90
      %p222 = pneg %p114
      %p223 = pneg %p111
      %p224 = pneg %p135
      %p225 = pneg %p132
      %p226 = pneg %p161
      %p227 = pneg %p158
      %p228 = scmp.lt.s32.totalorder %s20, 1
      %s229 = scalar_select %p228, %s20, 1
      %s230 = smul.addr %s229, 2
      %s231 = smul.addr %s230, 8
      %s232 = scalar_lea.vmem %s5, %s231
      %s233 = sadd.s32 %s20, %s21
      %s234 = smul.u32 8, %s233
      %p235 = scmp.lt.s32.totalorder %s234, 15
      %s236 = scalar_select %p235, %s234, 15
      %s237 = smul.addr %s236, 8
      %s238 = scalar_lea.vmem %s0, %s237
      %s239 = sadd.s32 %s20, %s21
      %s240 = smul.u32 8, %s239
      %p241 = scmp.lt.s32.totalorder %s20, 1
      %s242 = scalar_select %p241, %s20, 1
      %s243 = smul.addr %s242, 2
      %s244 = smul.addr %s243, 8
      %s245 = scalar_lea.vmem %s5, %s244
      %p246 = scmp.eq.s32.totalorder %s21, 0
      // Predicated region
      $region41: #{tpu_custom_call.1} parent=39 // pred_check
        %p247 = pneg %p246
      $region42: #{tpu_custom_call.1} parent=39 // pred_check_branch
        %249 = sbr.rel (%p247) target = $region44
      $region43: #{tpu_custom_call.1} parent=39 // pred_region
        %vm250 = vcmask 72704
        %251 = vst.msk [vmem:[%s245] sm:$0xff] %vm250, 0.0
        %252 = vst.msk [vmem:[%s245 + $0x8] sm:$0xff] %vm250, 0.0
      $region44: #{tpu_custom_call.1} parent=39 // pred_fallthru
        _
      %v253 = vld [vmem:[%s238] sm:$0xff]
      %v254 = vld [vmem:[%s238 + $0x8] sm:$0xff]
      %v255 = vld [vmem:[%s238 + $0x10] sm:$0xff]
      %v256 = vld [vmem:[%s238 + $0x18] sm:$0xff]
      %v257 = vld [vmem:[%s238 + $0x20] sm:$0xff]
      %v258 = vld [vmem:[%s238 + $0x28] sm:$0xff]
      %v259 = vld [vmem:[%s238 + $0x30] sm:$0xff]
      %v260 = vld [vmem:[%s238 + $0x38] sm:$0xff]
      %v261 = vld [vmem:[%s1] sm:$0xff]
      %v262 = vld [vmem:[%s1 + $0x8] sm:$0xff]
      %v263 = vld [vmem:[%s2] sm:$0xff]
      %v264 = vld [vmem:[%s2 + $0x8] sm:$0xff]
      %v265 = vld [vmem:[%s3] sm:$0xff]
      %v266 = vld [vmem:[%s3 + $0x8] sm:$0xff]
      %v267 = vld [vmem:[%s4] sm:$0xff]
      %v268 = vld [vmem:[%s4 + $0x8] sm:$0xff]
      %vm269 = vcmask 130048
      %v271 = vsel %vm269, %v253, 0
      %v274 = vsel %vm269, %v254, 0
      %v277 = vsel %vm269, %v255, 0
      %v280 = vsel %vm269, %v256, 0
      %v283 = vsel %vm269, %v257, 0
      %v286 = vsel %vm269, %v258, 0
      %v289 = vsel %vm269, %v259, 0
      %v292 = vsel %vm269, %v260, 0
      %294 = vmatprep.subr.mxu0 0.0
      %295 = vmatpush1.msra.mxu0 %v261
      %296 = vmatprep.subr.mxu0 0.0
      %297 = vmatpush1.msra.mxu0 %v262
      %298 = vmatprep.subr.mxu0 0.0
      %299 = vmatpush1.msra.mxu0 0.0
      %300 = vmatprep.subr.mxu0 0.0
      %301 = vmatpush1.msra.mxu0 0.0
      %302 = vmatprep.subr.mxu0 0.0
      %303 = vmatpush1.msra.mxu0 0.0
      %304 = vmatprep.subr.mxu0 0.0
      %305 = vmatpush1.msra.mxu0 0.0
      %306 = vmatprep.subr.mxu0 0.0
      %307 = vmatpush1.msra.mxu0 0.0
      %308 = vmatprep.subr.mxu0 0.0
      %309 = vmatpush1.msra.mxu0 0.0
      %310 = vmatprep.subr.mxu0 0.0
      %311 = vmatpush1.msra.mxu0 0.0
      %312 = vmatprep.subr.mxu0 0.0
      %313 = vmatpush1.msra.mxu0 0.0
      %314 = vmatprep.subr.mxu0 0.0
      %315 = vmatpush1.msra.mxu0 0.0
      %316 = vmatprep.subr.mxu0 0.0
      %317 = vmatpush1.msra.mxu0 0.0
      %318 = vmatprep.subr.mxu0 0.0
      %319 = vmatpush1.msra.mxu0 0.0
      %320 = vmatprep.subr.mxu0 0.0
      %321 = vmatpush1.msra.mxu0 0.0
      %322 = vmatprep.subr.mxu0 0.0
      %323 = vmatpush1.msra.mxu0 0.0
      %324 = vmatprep.subr.mxu0 0.0
      %325 = vmatpush1.msra.mxu0 0.0
      %326 = vmatprep.subr.mxu0 0.0
      %327 = vmatpush1.msra.mxu0 0.0
      %328 = vmatprep.subr.mxu0 0.0
      %329 = vmatpush1.msra.mxu0 0.0
      %330 = vmatprep.subr.mxu0 0.0
      %331 = vmatpush1.msra.mxu0 0.0
      %332 = vmatprep.subr.mxu0 0.0
      %333 = vmatpush1.msra.mxu0 0.0
      %334 = vmatprep.subr.mxu0 0.0
      %335 = vmatpush1.msra.mxu0 0.0
      %336 = vmatprep.subr.mxu0 0.0
      %337 = vmatpush1.msra.mxu0 0.0
      %338 = vmatprep.subr.mxu0 0.0
      %339 = vmatpush1.msra.mxu0 0.0
      %340 = vmatprep.subr.mxu0 0.0
      %341 = vmatpush1.msra.mxu0 0.0
      %342 = vmatprep.subr.mxu0 0.0
      %343 = vmatpush1.msra.mxu0 0.0
      %344 = vmatprep.subr.mxu0 0.0
      %345 = vmatpush1.msra.mxu0 0.0
      %346 = vmatprep.subr.mxu0 0.0
      %347 = vmatpush1.msra.mxu0 0.0
      %348 = vmatprep.subr.mxu0 0.0
      %349 = vmatpush1.msra.mxu0 0.0
      %350 = vmatprep.subr.mxu0 0.0
      %351 = vmatpush1.msra.mxu0 0.0
      %352 = vmatprep.subr.mxu0 0.0
      %353 = vmatpush1.msra.mxu0 0.0
      %354 = vmatprep.subr.mxu0 0.0
      %355 = vmatpush1.msra.mxu0 0.0
      %356 = vmatprep.subr.mxu0 0.0
      %357 = vmatpush1.msra.mxu0 0.0
      %358 = vmatprep.mubr.f32.mxu0 0.0
      %359 = vmatmul.mubr.f32.gmra.mrb[0].mxu0 %v271
      %v360 = vpop.f32.mrb[0].mxu0
      %v361 = vadd.f32 0.0, %v360
      %v362 = vpop.f32.mrb[0].mxu0
      %363 = vmatprep.mubr.f32.mxu0 0.0
      %364 = vmatmul.mubr.f32.gmra.mrb[0].mxu0 %v274
      %v365 = vpop.f32.mrb[0].mxu0
      %v366 = vadd.f32 0.0, %v365
      %v367 = vpop.f32.mrb[0].mxu0
      %368 = vmatprep.mubr.f32.mxu0 0.0
      %369 = vmatmul.mubr.f32.gmra.mrb[0].mxu0 %v277
      %v370 = vpop.f32.mrb[0].mxu0
      %v371 = vadd.f32 0.0, %v370
      %v372 = vpop.f32.mrb[0].mxu0
      %373 = vmatprep.mubr.f32.mxu0 0.0
      %374 = vmatmul.mubr.f32.gmra.mrb[0].mxu0 %v280
      %v375 = vpop.f32.mrb[0].mxu0
      %v376 = vadd.f32 0.0, %v375
      %v377 = vpop.f32.mrb[0].mxu0
      %378 = vmatprep.mubr.f32.mxu0 0.0
      %379 = vmatmul.mubr.f32.gmra.mrb[0].mxu0 %v283
      %v380 = vpop.f32.mrb[0].mxu0
      %v381 = vadd.f32 0.0, %v380
      %v382 = vpop.f32.mrb[0].mxu0
      %383 = vmatprep.mubr.f32.mxu0 0.0
      %384 = vmatmul.mubr.f32.gmra.mrb[0].mxu0 %v286
      %v385 = vpop.f32.mrb[0].mxu0
      %v386 = vadd.f32 0.0, %v385
      %v387 = vpop.f32.mrb[0].mxu0
      %388 = vmatprep.mubr.f32.mxu0 0.0
      %389 = vmatmul.mubr.f32.gmra.mrb[0].mxu0 %v289
      %v390 = vpop.f32.mrb[0].mxu0
      %v391 = vadd.f32 0.0, %v390
      %v392 = vpop.f32.mrb[0].mxu0
      %393 = vmatprep.mubr.f32.mxu0 0.0
      %394 = vmatmul.mubr.f32.gmra.mrb[0].mxu0 %v292
      %v395 = vpop.f32.mrb[0].mxu0
      %v396 = vadd.f32 0.0, %v395
      %v397 = vpop.f32.mrb[0].mxu0
      %398 = vdwg.mxu0
      %399 = vmatprep.subr.mxu0 0.0
      %400 = vmatpush1.msra.mxu0 %v263
      %401 = vmatprep.subr.mxu0 0.0
      %402 = vmatpush1.msra.mxu0 %v264
      %403 = vmatprep.subr.mxu0 0.0
      %404 = vmatpush1.msra.mxu0 0.0
      %405 = vmatprep.subr.mxu0 0.0
      %406 = vmatpush1.msra.mxu0 0.0
      %407 = vmatprep.subr.mxu0 0.0
      %408 = vmatpush1.msra.mxu0 0.0
      %409 = vmatprep.subr.mxu0 0.0
      %410 = vmatpush1.msra.mxu0 0.0
      %411 = vmatprep.subr.mxu0 0.0
      %412 = vmatpush1.msra.mxu0 0.0
      %413 = vmatprep.subr.mxu0 0.0
      %414 = vmatpush1.msra.mxu0 0.0
      %415 = vmatprep.subr.mxu0 0.0
      %416 = vmatpush1.msra.mxu0 0.0
      %417 = vmatprep.subr.mxu0 0.0
      %418 = vmatpush1.msra.mxu0 0.0
      %419 = vmatprep.subr.mxu0 0.0
      %420 = vmatpush1.msra.mxu0 0.0
      %421 = vmatprep.subr.mxu0 0.0
      %422 = vmatpush1.msra.mxu0 0.0
      %423 = vmatprep.subr.mxu0 0.0
      %424 = vmatpush1.msra.mxu0 0.0
      %425 = vmatprep.subr.mxu0 0.0
      %426 = vmatpush1.msra.mxu0 0.0
      %427 = vmatprep.subr.mxu0 0.0
      %428 = vmatpush1.msra.mxu0 0.0
      %429 = vmatprep.subr.mxu0 0.0
      %430 = vmatpush1.msra.mxu0 0.0
      %431 = vmatprep.subr.mxu0 0.0
      %432 = vmatpush1.msra.mxu0 0.0
      %433 = vmatprep.subr.mxu0 0.0
      %434 = vmatpush1.msra.mxu0 0.0
      %435 = vmatprep.subr.mxu0 0.0
      %436 = vmatpush1.msra.mxu0 0.0
      %437 = vmatprep.subr.mxu0 0.0
      %438 = vmatpush1.msra.mxu0 0.0
      %439 = vmatprep.subr.mxu0 0.0
      %440 = vmatpush1.msra.mxu0 0.0
      %441 = vmatprep.subr.mxu0 0.0
      %442 = vmatpush1.msra.mxu0 0.0
      %443 = vmatprep.subr.mxu0 0.0
      %444 = vmatpush1.msra.mxu0 0.0
      %445 = vmatprep.subr.mxu0 0.0
      %446 = vmatpush1.msra.mxu0 0.0
      %447 = vmatprep.subr.mxu0 0.0
      %448 = vmatpush1.msra.mxu0 0.0
      %449 = vmatprep.subr.mxu0 0.0
      %450 = vmatpush1.msra.mxu0 0.0
      %451 = vmatprep.subr.mxu0 0.0
      %452 = vmatpush1.msra.mxu0 0.0
      %453 = vmatprep.subr.mxu0 0.0
      %454 = vmatpush1.msra.mxu0 0.0
      %455 = vmatprep.subr.mxu0 0.0
      %456 = vmatpush1.msra.mxu0 0.0
      %457 = vmatprep.subr.mxu0 0.0
      %458 = vmatpush1.msra.mxu0 0.0
      %459 = vmatprep.subr.mxu0 0.0
      %460 = vmatpush1.msra.mxu0 0.0
      %461 = vmatprep.subr.mxu0 0.0
      %462 = vmatpush1.msra.mxu0 0.0
      %463 = vmatprep.mubr.f32.mxu0 0.0
      %464 = vmatmul.mubr.f32.gmra.mrb[0].mxu0 %v271
      %v465 = vpop.f32.mrb[0].mxu0
      %v466 = vadd.f32 0.0, %v465
      %v467 = vpop.f32.mrb[0].mxu0
      %468 = vmatprep.mubr.f32.mxu0 0.0
      %469 = vmatmul.mubr.f32.gmra.mrb[0].mxu0 %v274
      %v470 = vpop.f32.mrb[0].mxu0
      %v471 = vadd.f32 0.0, %v470
      %v472 = vpop.f32.mrb[0].mxu0
      %473 = vmatprep.mubr.f32.mxu0 0.0
      %474 = vmatmul.mubr.f32.gmra.mrb[0].mxu0 %v277
      %v475 = vpop.f32.mrb[0].mxu0
      %v476 = vadd.f32 0.0, %v475
      %v477 = vpop.f32.mrb[0].mxu0
      %478 = vmatprep.mubr.f32.mxu0 0.0
      %479 = vmatmul.mubr.f32.gmra.mrb[0].mxu0 %v280
      %v480 = vpop.f32.mrb[0].mxu0
      %v481 = vadd.f32 0.0, %v480
      %v482 = vpop.f32.mrb[0].mxu0
      %483 = vmatprep.mubr.f32.mxu0 0.0
      %484 = vmatmul.mubr.f32.gmra.mrb[0].mxu0 %v283
      %v485 = vpop.f32.mrb[0].mxu0
      %v486 = vadd.f32 0.0, %v485
      %v487 = vpop.f32.mrb[0].mxu0
      %488 = vmatprep.mubr.f32.mxu0 0.0
      %489 = vmatmul.mubr.f32.gmra.mrb[0].mxu0 %v286
      %v490 = vpop.f32.mrb[0].mxu0
      %v491 = vadd.f32 0.0, %v490
      %v492 = vpop.f32.mrb[0].mxu0
      %493 = vmatprep.mubr.f32.mxu0 0.0
      %494 = vmatmul.mubr.f32.gmra.mrb[0].mxu0 %v289
      %v495 = vpop.f32.mrb[0].mxu0
      %v496 = vadd.f32 0.0, %v495
      %v497 = vpop.f32.mrb[0].mxu0
      %498 = vmatprep.mubr.f32.mxu0 0.0
      %499 = vmatmul.mubr.f32.gmra.mrb[0].mxu0 %v292
      %v500 = vpop.f32.mrb[0].mxu0
      %v501 = vadd.f32 0.0, %v500
      %v502 = vpop.f32.mrb[0].mxu0
      %503 = vdwg.mxu0
      %v505 = vsel %vm269, %v265, 0
      %v508 = vsel %vm269, %v266, 0
      %510 = vmatprep.subr.mxu0 0.0
      %511 = vmatpush1.msra.mxu0 %v361
      %512 = vmatprep.subr.mxu0 0.0
      %513 = vmatpush1.msra.mxu0 %v366
      %514 = vmatprep.subr.mxu0 0.0
      %515 = vmatpush1.msra.mxu0 0.0
      %516 = vmatprep.subr.mxu0 0.0
      %517 = vmatpush1.msra.mxu0 0.0
      %518 = vmatprep.subr.mxu0 0.0
      %519 = vmatpush1.msra.mxu0 0.0
      %520 = vmatprep.subr.mxu0 0.0
      %521 = vmatpush1.msra.mxu0 0.0
      %522 = vmatprep.subr.mxu0 0.0
      %523 = vmatpush1.msra.mxu0 0.0
      %524 = vmatprep.subr.mxu0 0.0
      %525 = vmatpush1.msra.mxu0 0.0
      %526 = vmatprep.subr.mxu0 0.0
      %527 = vmatpush1.msra.mxu0 0.0
      %528 = vmatprep.subr.mxu0 0.0
      %529 = vmatpush1.msra.mxu0 0.0
      %530 = vmatprep.subr.mxu0 0.0
      %531 = vmatpush1.msra.mxu0 0.0
      %532 = vmatprep.subr.mxu0 0.0
      %533 = vmatpush1.msra.mxu0 0.0
      %534 = vmatprep.subr.mxu0 0.0
      %535 = vmatpush1.msra.mxu0 0.0
      %536 = vmatprep.subr.mxu0 0.0
      %537 = vmatpush1.msra.mxu0 0.0
      %538 = vmatprep.subr.mxu0 0.0
      %539 = vmatpush1.msra.mxu0 0.0
      %540 = vmatprep.subr.mxu0 0.0
      %541 = vmatpush1.msra.mxu0 0.0
      %542 = vmatprep.subr.mxu0 0.0
      %543 = vmatpush1.msra.mxu0 0.0
      %544 = vmatprep.subr.mxu0 0.0
      %545 = vmatpush1.msra.mxu0 0.0
      %546 = vmatprep.subr.mxu0 0.0
      %547 = vmatpush1.msra.mxu0 0.0
      %548 = vmatprep.subr.mxu0 0.0
      %549 = vmatpush1.msra.mxu0 0.0
      %550 = vmatprep.subr.mxu0 0.0
      %551 = vmatpush1.msra.mxu0 0.0
      %552 = vmatprep.subr.mxu0 0.0
      %553 = vmatpush1.msra.mxu0 0.0
      %554 = vmatprep.subr.mxu0 0.0
      %555 = vmatpush1.msra.mxu0 0.0
      %556 = vmatprep.subr.mxu0 0.0
      %557 = vmatpush1.msra.mxu0 0.0
      %558 = vmatprep.subr.mxu0 0.0
      %559 = vmatpush1.msra.mxu0 0.0
      %560 = vmatprep.subr.mxu0 0.0
      %561 = vmatpush1.msra.mxu0 0.0
      %562 = vmatprep.subr.mxu0 0.0
      %563 = vmatpush1.msra.mxu0 0.0
      %564 = vmatprep.subr.mxu0 0.0
      %565 = vmatpush1.msra.mxu0 0.0
      %566 = vmatprep.subr.mxu0 0.0
      %567 = vmatpush1.msra.mxu0 0.0
      %568 = vmatprep.subr.mxu0 0.0
      %569 = vmatpush1.msra.mxu0 0.0
      %570 = vmatprep.subr.mxu0 0.0
      %571 = vmatpush1.msra.mxu0 0.0
      %572 = vmatprep.subr.mxu0 0.0
      %573 = vmatpush1.msra.mxu0 0.0
      %574 = vmatprep.mubr.f32.mxu0 0.0
      %575 = vmatmul.mubr.f32.gmra.mrb[0].mxu0 %v505
      %v576 = vpop.f32.mrb[0].mxu0
      %v577 = vadd.f32 0.0, %v576
      %v578 = vpop.f32.mrb[0].mxu0
      %579 = vmatprep.mubr.f32.mxu0 0.0
      %580 = vmatmul.mubr.f32.gmra.mrb[0].mxu0 %v508
      %v581 = vpop.f32.mrb[0].mxu0
      %v582 = vadd.f32 0.0, %v581
      %v583 = vpop.f32.mrb[0].mxu0
      %584 = vdwg.mxu0
      %v586 = vsel %vm269, %v267, 0
      %v589 = vsel %vm269, %v268, 0
      %591 = vmatprep.subr.mxu0 0.0
      %592 = vmatpush1.msra.mxu0 %v466
      %593 = vmatprep.subr.mxu0 0.0
      %594 = vmatpush1.msra.mxu0 %v471
      %595 = vmatprep.subr.mxu0 0.0
      %596 = vmatpush1.msra.mxu0 0.0
      %597 = vmatprep.subr.mxu0 0.0
      %598 = vmatpush1.msra.mxu0 0.0
      %599 = vmatprep.subr.mxu0 0.0
      %600 = vmatpush1.msra.mxu0 0.0
      %601 = vmatprep.subr.mxu0 0.0
      %602 = vmatpush1.msra.mxu0 0.0
      %603 = vmatprep.subr.mxu0 0.0
      %604 = vmatpush1.msra.mxu0 0.0
      %605 = vmatprep.subr.mxu0 0.0
      %606 = vmatpush1.msra.mxu0 0.0
      %607 = vmatprep.subr.mxu0 0.0
      %608 = vmatpush1.msra.mxu0 0.0
      %609 = vmatprep.subr.mxu0 0.0
      %610 = vmatpush1.msra.mxu0 0.0
      %611 = vmatprep.subr.mxu0 0.0
      %612 = vmatpush1.msra.mxu0 0.0
      %613 = vmatprep.subr.mxu0 0.0
      %614 = vmatpush1.msra.mxu0 0.0
      %615 = vmatprep.subr.mxu0 0.0
      %616 = vmatpush1.msra.mxu0 0.0
      %617 = vmatprep.subr.mxu0 0.0
      %618 = vmatpush1.msra.mxu0 0.0
      %619 = vmatprep.subr.mxu0 0.0
      %620 = vmatpush1.msra.mxu0 0.0
      %621 = vmatprep.subr.mxu0 0.0
      %622 = vmatpush1.msra.mxu0 0.0
      %623 = vmatprep.subr.mxu0 0.0
      %624 = vmatpush1.msra.mxu0 0.0
      %625 = vmatprep.subr.mxu0 0.0
      %626 = vmatpush1.msra.mxu0 0.0
      %627 = vmatprep.subr.mxu0 0.0
      %628 = vmatpush1.msra.mxu0 0.0
      %629 = vmatprep.subr.mxu0 0.0
      %630 = vmatpush1.msra.mxu0 0.0
      %631 = vmatprep.subr.mxu0 0.0
      %632 = vmatpush1.msra.mxu0 0.0
      %633 = vmatprep.subr.mxu0 0.0
      %634 = vmatpush1.msra.mxu0 0.0
      %635 = vmatprep.subr.mxu0 0.0
      %636 = vmatpush1.msra.mxu0 0.0
      %637 = vmatprep.subr.mxu0 0.0
      %638 = vmatpush1.msra.mxu0 0.0
      %639 = vmatprep.subr.mxu0 0.0
      %640 = vmatpush1.msra.mxu0 0.0
      %641 = vmatprep.subr.mxu0 0.0
      %642 = vmatpush1.msra.mxu0 0.0
      %643 = vmatprep.subr.mxu0 0.0
      %644 = vmatpush1.msra.mxu0 0.0
      %645 = vmatprep.subr.mxu0 0.0
      %646 = vmatpush1.msra.mxu0 0.0
      %647 = vmatprep.subr.mxu0 0.0
      %648 = vmatpush1.msra.mxu0 0.0
      %649 = vmatprep.subr.mxu0 0.0
      %650 = vmatpush1.msra.mxu0 0.0
      %651 = vmatprep.subr.mxu0 0.0
      %652 = vmatpush1.msra.mxu0 0.0
      %653 = vmatprep.subr.mxu0 0.0
      %654 = vmatpush1.msra.mxu0 0.0
      %655 = vmatprep.mubr.f32.mxu0 0.0
      %656 = vmatmul.mubr.f32.gmra.mrb[0].mxu0 %v586
      %v657 = vpop.f32.mrb[0].mxu0
      %v658 = vadd.f32 0.0, %v657
      %v659 = vpop.f32.mrb[0].mxu0
      %660 = vmatprep.mubr.f32.mxu0 0.0
      %661 = vmatmul.mubr.f32.gmra.mrb[0].mxu0 %v589
      %v662 = vpop.f32.mrb[0].mxu0
      %v663 = vadd.f32 0.0, %v662
      %v664 = vpop.f32.mrb[0].mxu0
      %665 = vdwg.mxu0
      %666 = vmatprep.subr.mxu0 0.0
      %667 = vmatpush1.msra.mxu0 %v361
      %668 = vmatprep.subr.mxu0 0.0
      %669 = vmatpush1.msra.mxu0 %v366
      %670 = vmatprep.subr.mxu0 0.0
      %671 = vmatpush1.msra.mxu0 0.0
      %672 = vmatprep.subr.mxu0 0.0
      %673 = vmatpush1.msra.mxu0 0.0
      %674 = vmatprep.subr.mxu0 0.0
      %675 = vmatpush1.msra.mxu0 0.0
      %676 = vmatprep.subr.mxu0 0.0
      %677 = vmatpush1.msra.mxu0 0.0
      %678 = vmatprep.subr.mxu0 0.0
      %679 = vmatpush1.msra.mxu0 0.0
      %680 = vmatprep.subr.mxu0 0.0
      %681 = vmatpush1.msra.mxu0 0.0
      %682 = vmatprep.subr.mxu0 0.0
      %683 = vmatpush1.msra.mxu0 0.0
      %684 = vmatprep.subr.mxu0 0.0
      %685 = vmatpush1.msra.mxu0 0.0
      %686 = vmatprep.subr.mxu0 0.0
      %687 = vmatpush1.msra.mxu0 0.0
      %688 = vmatprep.subr.mxu0 0.0
      %689 = vmatpush1.msra.mxu0 0.0
      %690 = vmatprep.subr.mxu0 0.0
      %691 = vmatpush1.msra.mxu0 0.0
      %692 = vmatprep.subr.mxu0 0.0
      %693 = vmatpush1.msra.mxu0 0.0
      %694 = vmatprep.subr.mxu0 0.0
      %695 = vmatpush1.msra.mxu0 0.0
      %696 = vmatprep.subr.mxu0 0.0
      %697 = vmatpush1.msra.mxu0 0.0
      %698 = vmatprep.subr.mxu0 0.0
      %699 = vmatpush1.msra.mxu0 0.0
      %700 = vmatprep.subr.mxu0 0.0
      %701 = vmatpush1.msra.mxu0 0.0
      %702 = vmatprep.subr.mxu0 0.0
      %703 = vmatpush1.msra.mxu0 0.0
      %704 = vmatprep.subr.mxu0 0.0
      %705 = vmatpush1.msra.mxu0 0.0
      %706 = vmatprep.subr.mxu0 0.0
      %707 = vmatpush1.msra.mxu0 0.0
      %708 = vmatprep.subr.mxu0 0.0
      %709 = vmatpush1.msra.mxu0 0.0
      %710 = vmatprep.subr.mxu0 0.0
      %711 = vmatpush1.msra.mxu0 0.0
      %712 = vmatprep.subr.mxu0 0.0
      %713 = vmatpush1.msra.mxu0 0.0
      %714 = vmatprep.subr.mxu0 0.0
      %715 = vmatpush1.msra.mxu0 0.0
      %716 = vmatprep.subr.mxu0 0.0
      %717 = vmatpush1.msra.mxu0 0.0
      %718 = vmatprep.subr.mxu0 0.0
      %719 = vmatpush1.msra.mxu0 0.0
      %720 = vmatprep.subr.mxu0 0.0
      %721 = vmatpush1.msra.mxu0 0.0
      %722 = vmatprep.subr.mxu0 0.0
      %723 = vmatpush1.msra.mxu0 0.0
      %724 = vmatprep.subr.mxu0 0.0
      %725 = vmatpush1.msra.mxu0 0.0
      %726 = vmatprep.subr.mxu0 0.0
      %727 = vmatpush1.msra.mxu0 0.0
      %728 = vmatprep.subr.mxu0 0.0
      %729 = vmatpush1.msra.mxu0 0.0
      %730 = vmatprep.mubr.f32.mxu0 0.0
      %731 = vmatmul.mubr.f32.gmra.mrb[0].mxu0 %v586
      %v732 = vpop.f32.mrb[0].mxu0
      %v733 = vadd.f32 0.0, %v732
      %v734 = vpop.f32.mrb[0].mxu0
      %735 = vmatprep.mubr.f32.mxu0 0.0
      %736 = vmatmul.mubr.f32.gmra.mrb[0].mxu0 %v589
      %v737 = vpop.f32.mrb[0].mxu0
      %v738 = vadd.f32 0.0, %v737
      %v739 = vpop.f32.mrb[0].mxu0
      %740 = vdwg.mxu0
      %v741 = vsub.f32 %v577, %v658
      %v742 = vsub.f32 %v582, %v663
      %743 = vmatprep.subr.mxu0 0.0
      %744 = vmatpush1.msra.mxu0 %v466
      %745 = vmatprep.subr.mxu0 0.0
      %746 = vmatpush1.msra.mxu0 %v471
      %747 = vmatprep.subr.mxu0 0.0
      %748 = vmatpush1.msra.mxu0 0.0
      %749 = vmatprep.subr.mxu0 0.0
      %750 = vmatpush1.msra.mxu0 0.0
      %751 = vmatprep.subr.mxu0 0.0
      %752 = vmatpush1.msra.mxu0 0.0
      %753 = vmatprep.subr.mxu0 0.0
      %754 = vmatpush1.msra.mxu0 0.0
      %755 = vmatprep.subr.mxu0 0.0
      %756 = vmatpush1.msra.mxu0 0.0
      %757 = vmatprep.subr.mxu0 0.0
      %758 = vmatpush1.msra.mxu0 0.0
      %759 = vmatprep.subr.mxu0 0.0
      %760 = vmatpush1.msra.mxu0 0.0
      %761 = vmatprep.subr.mxu0 0.0
      %762 = vmatpush1.msra.mxu0 0.0
      %763 = vmatprep.subr.mxu0 0.0
      %764 = vmatpush1.msra.mxu0 0.0
      %765 = vmatprep.subr.mxu0 0.0
      %766 = vmatpush1.msra.mxu0 0.0
      %767 = vmatprep.subr.mxu0 0.0
      %768 = vmatpush1.msra.mxu0 0.0
      %769 = vmatprep.subr.mxu0 0.0
      %770 = vmatpush1.msra.mxu0 0.0
      %771 = vmatprep.subr.mxu0 0.0
      %772 = vmatpush1.msra.mxu0 0.0
      %773 = vmatprep.subr.mxu0 0.0
      %774 = vmatpush1.msra.mxu0 0.0
      %775 = vmatprep.subr.mxu0 0.0
      %776 = vmatpush1.msra.mxu0 0.0
      %777 = vmatprep.subr.mxu0 0.0
      %778 = vmatpush1.msra.mxu0 0.0
      %779 = vmatprep.subr.mxu0 0.0
      %780 = vmatpush1.msra.mxu0 0.0
      %781 = vmatprep.subr.mxu0 0.0
      %782 = vmatpush1.msra.mxu0 0.0
      %783 = vmatprep.subr.mxu0 0.0
      %784 = vmatpush1.msra.mxu0 0.0
      %785 = vmatprep.subr.mxu0 0.0
      %786 = vmatpush1.msra.mxu0 0.0
      %787 = vmatprep.subr.mxu0 0.0
      %788 = vmatpush1.msra.mxu0 0.0
      %789 = vmatprep.subr.mxu0 0.0
      %790 = vmatpush1.msra.mxu0 0.0
      %791 = vmatprep.subr.mxu0 0.0
      %792 = vmatpush1.msra.mxu0 0.0
      %793 = vmatprep.subr.mxu0 0.0
      %794 = vmatpush1.msra.mxu0 0.0
      %795 = vmatprep.subr.mxu0 0.0
      %796 = vmatpush1.msra.mxu0 0.0
      %797 = vmatprep.subr.mxu0 0.0
      %798 = vmatpush1.msra.mxu0 0.0
      %799 = vmatprep.subr.mxu0 0.0
      %800 = vmatpush1.msra.mxu0 0.0
      %801 = vmatprep.subr.mxu0 0.0
      %802 = vmatpush1.msra.mxu0 0.0
      %803 = vmatprep.subr.mxu0 0.0
      %804 = vmatpush1.msra.mxu0 0.0
      %805 = vmatprep.subr.mxu0 0.0
      %806 = vmatpush1.msra.mxu0 0.0
      %807 = vmatprep.mubr.f32.mxu0 0.0
      %808 = vmatmul.mubr.f32.gmra.mrb[0].mxu0 %v505
      %v809 = vpop.f32.mrb[0].mxu0
      %v810 = vadd.f32 %v733, %v809
      %v811 = vpop.f32.mrb[0].mxu0
      %812 = vmatprep.mubr.f32.mxu0 0.0
      %813 = vmatmul.mubr.f32.gmra.mrb[0].mxu0 %v508
      %v814 = vpop.f32.mrb[0].mxu0
      %v815 = vadd.f32 %v738, %v814
      %v816 = vpop.f32.mrb[0].mxu0
      %817 = vdwg.mxu0
      %v818 = vmul.f32 %v741, %v741
      %v819 = vmul.f32 %v742, %v742
      %v820 = vadd.f32 %v818, 0.0
      %v821 = vadd.f32 %v819, 0.0
      %v822 = vmul.f32 %v810, %v810
      %v823 = vmul.f32 %v815, %v815
      %v824 = vadd.f32 %v820, %v822
      %v825 = vadd.f32 %v821, %v823
      %826 = vmatprep.subr.mxu0 0.0
      %827 = vmatpush1.msra.mxu0 %v371
      %828 = vmatprep.subr.mxu0 0.0
      %829 = vmatpush1.msra.mxu0 %v376
      %830 = vmatprep.subr.mxu0 0.0
      %831 = vmatpush1.msra.mxu0 0.0
      %832 = vmatprep.subr.mxu0 0.0
      %833 = vmatpush1.msra.mxu0 0.0
      %834 = vmatprep.subr.mxu0 0.0
      %835 = vmatpush1.msra.mxu0 0.0
      %836 = vmatprep.subr.mxu0 0.0
      %837 = vmatpush1.msra.mxu0 0.0
      %838 = vmatprep.subr.mxu0 0.0
      %839 = vmatpush1.msra.mxu0 0.0
      %840 = vmatprep.subr.mxu0 0.0
      %841 = vmatpush1.msra.mxu0 0.0
      %842 = vmatprep.subr.mxu0 0.0
      %843 = vmatpush1.msra.mxu0 0.0
      %844 = vmatprep.subr.mxu0 0.0
      %845 = vmatpush1.msra.mxu0 0.0
      %846 = vmatprep.subr.mxu0 0.0
      %847 = vmatpush1.msra.mxu0 0.0
      %848 = vmatprep.subr.mxu0 0.0
      %849 = vmatpush1.msra.mxu0 0.0
      %850 = vmatprep.subr.mxu0 0.0
      %851 = vmatpush1.msra.mxu0 0.0
      %852 = vmatprep.subr.mxu0 0.0
      %853 = vmatpush1.msra.mxu0 0.0
      %854 = vmatprep.subr.mxu0 0.0
      %855 = vmatpush1.msra.mxu0 0.0
      %856 = vmatprep.subr.mxu0 0.0
      %857 = vmatpush1.msra.mxu0 0.0
      %858 = vmatprep.subr.mxu0 0.0
      %859 = vmatpush1.msra.mxu0 0.0
      %860 = vmatprep.subr.mxu0 0.0
      %861 = vmatpush1.msra.mxu0 0.0
      %862 = vmatprep.subr.mxu0 0.0
      %863 = vmatpush1.msra.mxu0 0.0
      %864 = vmatprep.subr.mxu0 0.0
      %865 = vmatpush1.msra.mxu0 0.0
      %866 = vmatprep.subr.mxu0 0.0
      %867 = vmatpush1.msra.mxu0 0.0
      %868 = vmatprep.subr.mxu0 0.0
      %869 = vmatpush1.msra.mxu0 0.0
      %870 = vmatprep.subr.mxu0 0.0
      %871 = vmatpush1.msra.mxu0 0.0
      %872 = vmatprep.subr.mxu0 0.0
      %873 = vmatpush1.msra.mxu0 0.0
      %874 = vmatprep.subr.mxu0 0.0
      %875 = vmatpush1.msra.mxu0 0.0
      %876 = vmatprep.subr.mxu0 0.0
      %877 = vmatpush1.msra.mxu0 0.0
      %878 = vmatprep.subr.mxu0 0.0
      %879 = vmatpush1.msra.mxu0 0.0
      %880 = vmatprep.subr.mxu0 0.0
      %881 = vmatpush1.msra.mxu0 0.0
      %882 = vmatprep.subr.mxu0 0.0
      %883 = vmatpush1.msra.mxu0 0.0
      %884 = vmatprep.subr.mxu0 0.0
      %885 = vmatpush1.msra.mxu0 0.0
      %886 = vmatprep.subr.mxu0 0.0
      %887 = vmatpush1.msra.mxu0 0.0
      %888 = vmatprep.subr.mxu0 0.0
      %889 = vmatpush1.msra.mxu0 0.0
      %890 = vmatprep.mubr.f32.mxu0 0.0
      %891 = vmatmul.mubr.f32.gmra.mrb[0].mxu0 %v505
      %v892 = vpop.f32.mrb[0].mxu0
      %v893 = vadd.f32 0.0, %v892
      %v894 = vpop.f32.mrb[0].mxu0
      %895 = vmatprep.mubr.f32.mxu0 0.0
      %896 = vmatmul.mubr.f32.gmra.mrb[0].mxu0 %v508
      %v897 = vpop.f32.mrb[0].mxu0
      %v898 = vadd.f32 0.0, %v897
      %v899 = vpop.f32.mrb[0].mxu0
      %900 = vdwg.mxu0
      %901 = vmatprep.subr.mxu0 0.0
      %902 = vmatpush1.msra.mxu0 %v476
      %903 = vmatprep.subr.mxu0 0.0
      %904 = vmatpush1.msra.mxu0 %v481
      %905 = vmatprep.subr.mxu0 0.0
      %906 = vmatpush1.msra.mxu0 0.0
      %907 = vmatprep.subr.mxu0 0.0
      %908 = vmatpush1.msra.mxu0 0.0
      %909 = vmatprep.subr.mxu0 0.0
      %910 = vmatpush1.msra.mxu0 0.0
      %911 = vmatprep.subr.mxu0 0.0
      %912 = vmatpush1.msra.mxu0 0.0
      %913 = vmatprep.subr.mxu0 0.0
      %914 = vmatpush1.msra.mxu0 0.0
      %915 = vmatprep.subr.mxu0 0.0
      %916 = vmatpush1.msra.mxu0 0.0
      %917 = vmatprep.subr.mxu0 0.0
      %918 = vmatpush1.msra.mxu0 0.0
      %919 = vmatprep.subr.mxu0 0.0
      %920 = vmatpush1.msra.mxu0 0.0
      %921 = vmatprep.subr.mxu0 0.0
      %922 = vmatpush1.msra.mxu0 0.0
      %923 = vmatprep.subr.mxu0 0.0
      %924 = vmatpush1.msra.mxu0 0.0
      %925 = vmatprep.subr.mxu0 0.0
      %926 = vmatpush1.msra.mxu0 0.0
      %927 = vmatprep.subr.mxu0 0.0
      %928 = vmatpush1.msra.mxu0 0.0
      %929 = vmatprep.subr.mxu0 0.0
      %930 = vmatpush1.msra.mxu0 0.0
      %931 = vmatprep.subr.mxu0 0.0
      %932 = vmatpush1.msra.mxu0 0.0
      %933 = vmatprep.subr.mxu0 0.0
      %934 = vmatpush1.msra.mxu0 0.0
      %935 = vmatprep.subr.mxu0 0.0
      %936 = vmatpush1.msra.mxu0 0.0
      %937 = vmatprep.subr.mxu0 0.0
      %938 = vmatpush1.msra.mxu0 0.0
      %939 = vmatprep.subr.mxu0 0.0
      %940 = vmatpush1.msra.mxu0 0.0
      %941 = vmatprep.subr.mxu0 0.0
      %942 = vmatpush1.msra.mxu0 0.0
      %943 = vmatprep.subr.mxu0 0.0
      %944 = vmatpush1.msra.mxu0 0.0
      %945 = vmatprep.subr.mxu0 0.0
      %946 = vmatpush1.msra.mxu0 0.0
      %947 = vmatprep.subr.mxu0 0.0
      %948 = vmatpush1.msra.mxu0 0.0
      %949 = vmatprep.subr.mxu0 0.0
      %950 = vmatpush1.msra.mxu0 0.0
      %951 = vmatprep.subr.mxu0 0.0
      %952 = vmatpush1.msra.mxu0 0.0
      %953 = vmatprep.subr.mxu0 0.0
      %954 = vmatpush1.msra.mxu0 0.0
      %955 = vmatprep.subr.mxu0 0.0
      %956 = vmatpush1.msra.mxu0 0.0
      %957 = vmatprep.subr.mxu0 0.0
      %958 = vmatpush1.msra.mxu0 0.0
      %959 = vmatprep.subr.mxu0 0.0
      %960 = vmatpush1.msra.mxu0 0.0
      %961 = vmatprep.subr.mxu0 0.0
      %962 = vmatpush1.msra.mxu0 0.0
      %963 = vmatprep.subr.mxu0 0.0
      %964 = vmatpush1.msra.mxu0 0.0
      %965 = vmatprep.mubr.f32.mxu0 0.0
      %966 = vmatmul.mubr.f32.gmra.mrb[0].mxu0 %v586
      %v967 = vpop.f32.mrb[0].mxu0
      %v968 = vadd.f32 0.0, %v967
      %v969 = vpop.f32.mrb[0].mxu0
      %970 = vmatprep.mubr.f32.mxu0 0.0
      %971 = vmatmul.mubr.f32.gmra.mrb[0].mxu0 %v589
      %v972 = vpop.f32.mrb[0].mxu0
      %v973 = vadd.f32 0.0, %v972
      %v974 = vpop.f32.mrb[0].mxu0
      %975 = vdwg.mxu0
      %976 = vmatprep.subr.mxu0 0.0
      %977 = vmatpush1.msra.mxu0 %v371
      %978 = vmatprep.subr.mxu0 0.0
      %979 = vmatpush1.msra.mxu0 %v376
      %980 = vmatprep.subr.mxu0 0.0
      %981 = vmatpush1.msra.mxu0 0.0
      %982 = vmatprep.subr.mxu0 0.0
      %983 = vmatpush1.msra.mxu0 0.0
      %984 = vmatprep.subr.mxu0 0.0
      %985 = vmatpush1.msra.mxu0 0.0
      %986 = vmatprep.subr.mxu0 0.0
      %987 = vmatpush1.msra.mxu0 0.0
      %988 = vmatprep.subr.mxu0 0.0
      %989 = vmatpush1.msra.mxu0 0.0
      %990 = vmatprep.subr.mxu0 0.0
      %991 = vmatpush1.msra.mxu0 0.0
      %992 = vmatprep.subr.mxu0 0.0
      %993 = vmatpush1.msra.mxu0 0.0
      %994 = vmatprep.subr.mxu0 0.0
      %995 = vmatpush1.msra.mxu0 0.0
      %996 = vmatprep.subr.mxu0 0.0
      %997 = vmatpush1.msra.mxu0 0.0
      %998 = vmatprep.subr.mxu0 0.0
      %999 = vmatpush1.msra.mxu0 0.0
      %1000 = vmatprep.subr.mxu0 0.0
      %1001 = vmatpush1.msra.mxu0 0.0
      %1002 = vmatprep.subr.mxu0 0.0
      %1003 = vmatpush1.msra.mxu0 0.0
      %1004 = vmatprep.subr.mxu0 0.0
      %1005 = vmatpush1.msra.mxu0 0.0
      %1006 = vmatprep.subr.mxu0 0.0
      %1007 = vmatpush1.msra.mxu0 0.0
      %1008 = vmatprep.subr.mxu0 0.0
      %1009 = vmatpush1.msra.mxu0 0.0
      %1010 = vmatprep.subr.mxu0 0.0
      %1011 = vmatpush1.msra.mxu0 0.0
      %1012 = vmatprep.subr.mxu0 0.0
      %1013 = vmatpush1.msra.mxu0 0.0
      %1014 = vmatprep.subr.mxu0 0.0
      %1015 = vmatpush1.msra.mxu0 0.0
      %1016 = vmatprep.subr.mxu0 0.0
      %1017 = vmatpush1.msra.mxu0 0.0
      %1018 = vmatprep.subr.mxu0 0.0
      %1019 = vmatpush1.msra.mxu0 0.0
      %1020 = vmatprep.subr.mxu0 0.0
      %1021 = vmatpush1.msra.mxu0 0.0
      %1022 = vmatprep.subr.mxu0 0.0
      %1023 = vmatpush1.msra.mxu0 0.0
      %1024 = vmatprep.subr.mxu0 0.0
      %1025 = vmatpush1.msra.mxu0 0.0
      %1026 = vmatprep.subr.mxu0 0.0
      %1027 = vmatpush1.msra.mxu0 0.0
      %1028 = vmatprep.subr.mxu0 0.0
      %1029 = vmatpush1.msra.mxu0 0.0
      %1030 = vmatprep.subr.mxu0 0.0
      %1031 = vmatpush1.msra.mxu0 0.0
      %1032 = vmatprep.subr.mxu0 0.0
      %1033 = vmatpush1.msra.mxu0 0.0
      %1034 = vmatprep.subr.mxu0 0.0
      %1035 = vmatpush1.msra.mxu0 0.0
      %1036 = vmatprep.subr.mxu0 0.0
      %1037 = vmatpush1.msra.mxu0 0.0
      %1038 = vmatprep.subr.mxu0 0.0
      %1039 = vmatpush1.msra.mxu0 0.0
      %1040 = vmatprep.mubr.f32.mxu0 0.0
      %1041 = vmatmul.mubr.f32.gmra.mrb[0].mxu0 %v586
      %v1042 = vpop.f32.mrb[0].mxu0
      %v1043 = vadd.f32 0.0, %v1042
      %v1044 = vpop.f32.mrb[0].mxu0
      %1045 = vmatprep.mubr.f32.mxu0 0.0
      %1046 = vmatmul.mubr.f32.gmra.mrb[0].mxu0 %v589
      %v1047 = vpop.f32.mrb[0].mxu0
      %v1048 = vadd.f32 0.0, %v1047
      %v1049 = vpop.f32.mrb[0].mxu0
      %1050 = vdwg.mxu0
      %v1051 = vsub.f32 %v893, %v968
      %v1052 = vsub.f32 %v898, %v973
      %1053 = vmatprep.subr.mxu0 0.0
      %1054 = vmatpush1.msra.mxu0 %v476
      %1055 = vmatprep.subr.mxu0 0.0
      %1056 = vmatpush1.msra.mxu0 %v481
      %1057 = vmatprep.subr.mxu0 0.0
      %1058 = vmatpush1.msra.mxu0 0.0
      %1059 = vmatprep.subr.mxu0 0.0
      %1060 = vmatpush1.msra.mxu0 0.0
      %1061 = vmatprep.subr.mxu0 0.0
      %1062 = vmatpush1.msra.mxu0 0.0
      %1063 = vmatprep.subr.mxu0 0.0
      %1064 = vmatpush1.msra.mxu0 0.0
      %1065 = vmatprep.subr.mxu0 0.0
      %1066 = vmatpush1.msra.mxu0 0.0
      %1067 = vmatprep.subr.mxu0 0.0
      %1068 = vmatpush1.msra.mxu0 0.0
      %1069 = vmatprep.subr.mxu0 0.0
      %1070 = vmatpush1.msra.mxu0 0.0
      %1071 = vmatprep.subr.mxu0 0.0
      %1072 = vmatpush1.msra.mxu0 0.0
      %1073 = vmatprep.subr.mxu0 0.0
      %1074 = vmatpush1.msra.mxu0 0.0
      %1075 = vmatprep.subr.mxu0 0.0
      %1076 = vmatpush1.msra.mxu0 0.0
      %1077 = vmatprep.subr.mxu0 0.0
      %1078 = vmatpush1.msra.mxu0 0.0
      %1079 = vmatprep.subr.mxu0 0.0
      %1080 = vmatpush1.msra.mxu0 0.0
      %1081 = vmatprep.subr.mxu0 0.0
      %1082 = vmatpush1.msra.mxu0 0.0
      %1083 = vmatprep.subr.mxu0 0.0
      %1084 = vmatpush1.msra.mxu0 0.0
      %1085 = vmatprep.subr.mxu0 0.0
      %1086 = vmatpush1.msra.mxu0 0.0
      %1087 = vmatprep.subr.mxu0 0.0
      %1088 = vmatpush1.msra.mxu0 0.0
      %1089 = vmatprep.subr.mxu0 0.0
      %1090 = vmatpush1.msra.mxu0 0.0
      %1091 = vmatprep.subr.mxu0 0.0
      %1092 = vmatpush1.msra.mxu0 0.0
      %1093 = vmatprep.subr.mxu0 0.0
      %1094 = vmatpush1.msra.mxu0 0.0
      %1095 = vmatprep.subr.mxu0 0.0
      %1096 = vmatpush1.msra.mxu0 0.0
      %1097 = vmatprep.subr.mxu0 0.0
      %1098 = vmatpush1.msra.mxu0 0.0
      %1099 = vmatprep.subr.mxu0 0.0
      %1100 = vmatpush1.msra.mxu0 0.0
      %1101 = vmatprep.subr.mxu0 0.0
      %1102 = vmatpush1.msra.mxu0 0.0
      %1103 = vmatprep.subr.mxu0 0.0
      %1104 = vmatpush1.msra.mxu0 0.0
      %1105 = vmatprep.subr.mxu0 0.0
      %1106 = vmatpush1.msra.mxu0 0.0
      %1107 = vmatprep.subr.mxu0 0.0
      %1108 = vmatpush1.msra.mxu0 0.0
      %1109 = vmatprep.subr.mxu0 0.0
      %1110 = vmatpush1.msra.mxu0 0.0
      %1111 = vmatprep.subr.mxu0 0.0
      %1112 = vmatpush1.msra.mxu0 0.0
      %1113 = vmatprep.subr.mxu0 0.0
      %1114 = vmatpush1.msra.mxu0 0.0
      %1115 = vmatprep.subr.mxu0 0.0
      %1116 = vmatpush1.msra.mxu0 0.0
      %1117 = vmatprep.mubr.f32.mxu0 0.0
      %1118 = vmatmul.mubr.f32.gmra.mrb[0].mxu0 %v505
      %v1119 = vpop.f32.mrb[0].mxu0
      %v1120 = vadd.f32 %v1043, %v1119
      %v1121 = vpop.f32.mrb[0].mxu0
      %1122 = vmatprep.mubr.f32.mxu0 0.0
      %1123 = vmatmul.mubr.f32.gmra.mrb[0].mxu0 %v508
      %v1124 = vpop.f32.mrb[0].mxu0
      %v1125 = vadd.f32 %v1048, %v1124
      %v1126 = vpop.f32.mrb[0].mxu0
      %1127 = vdwg.mxu0
      %v1128 = vmul.f32 %v1051, %v1051
      %v1129 = vmul.f32 %v1052, %v1052
      %v1130 = vadd.f32 %v824, %v1128
      %v1131 = vadd.f32 %v825, %v1129
      %v1132 = vmul.f32 %v1120, %v1120
      %v1133 = vmul.f32 %v1125, %v1125
      %v1134 = vadd.f32 %v1130, %v1132
      %v1135 = vadd.f32 %v1131, %v1133
      %1136 = vmatprep.subr.mxu0 0.0
      %1137 = vmatpush1.msra.mxu0 %v381
      %1138 = vmatprep.subr.mxu0 0.0
      %1139 = vmatpush1.msra.mxu0 %v386
      %1140 = vmatprep.subr.mxu0 0.0
      %1141 = vmatpush1.msra.mxu0 0.0
      %1142 = vmatprep.subr.mxu0 0.0
      %1143 = vmatpush1.msra.mxu0 0.0
      %1144 = vmatprep.subr.mxu0 0.0
      %1145 = vmatpush1.msra.mxu0 0.0
      %1146 = vmatprep.subr.mxu0 0.0
      %1147 = vmatpush1.msra.mxu0 0.0
      %1148 = vmatprep.subr.mxu0 0.0
      %1149 = vmatpush1.msra.mxu0 0.0
      %1150 = vmatprep.subr.mxu0 0.0
      %1151 = vmatpush1.msra.mxu0 0.0
      %1152 = vmatprep.subr.mxu0 0.0
      %1153 = vmatpush1.msra.mxu0 0.0
      %1154 = vmatprep.subr.mxu0 0.0
      %1155 = vmatpush1.msra.mxu0 0.0
      %1156 = vmatprep.subr.mxu0 0.0
      %1157 = vmatpush1.msra.mxu0 0.0
      %1158 = vmatprep.subr.mxu0 0.0
      %1159 = vmatpush1.msra.mxu0 0.0
      %1160 = vmatprep.subr.mxu0 0.0
      %1161 = vmatpush1.msra.mxu0 0.0
      %1162 = vmatprep.subr.mxu0 0.0
      %1163 = vmatpush1.msra.mxu0 0.0
      %1164 = vmatprep.subr.mxu0 0.0
      %1165 = vmatpush1.msra.mxu0 0.0
      %1166 = vmatprep.subr.mxu0 0.0
      %1167 = vmatpush1.msra.mxu0 0.0
      %1168 = vmatprep.subr.mxu0 0.0
      %1169 = vmatpush1.msra.mxu0 0.0
      %1170 = vmatprep.subr.mxu0 0.0
      %1171 = vmatpush1.msra.mxu0 0.0
      %1172 = vmatprep.subr.mxu0 0.0
      %1173 = vmatpush1.msra.mxu0 0.0
      %1174 = vmatprep.subr.mxu0 0.0
      %1175 = vmatpush1.msra.mxu0 0.0
      %1176 = vmatprep.subr.mxu0 0.0
      %1177 = vmatpush1.msra.mxu0 0.0
      %1178 = vmatprep.subr.mxu0 0.0
      %1179 = vmatpush1.msra.mxu0 0.0
      %1180 = vmatprep.subr.mxu0 0.0
      %1181 = vmatpush1.msra.mxu0 0.0
      %1182 = vmatprep.subr.mxu0 0.0
      %1183 = vmatpush1.msra.mxu0 0.0
      %1184 = vmatprep.subr.mxu0 0.0
      %1185 = vmatpush1.msra.mxu0 0.0
      %1186 = vmatprep.subr.mxu0 0.0
      %1187 = vmatpush1.msra.mxu0 0.0
      %1188 = vmatprep.subr.mxu0 0.0
      %1189 = vmatpush1.msra.mxu0 0.0
      %1190 = vmatprep.subr.mxu0 0.0
      %1191 = vmatpush1.msra.mxu0 0.0
      %1192 = vmatprep.subr.mxu0 0.0
      %1193 = vmatpush1.msra.mxu0 0.0
      %1194 = vmatprep.subr.mxu0 0.0
      %1195 = vmatpush1.msra.mxu0 0.0
      %1196 = vmatprep.subr.mxu0 0.0
      %1197 = vmatpush1.msra.mxu0 0.0
      %1198 = vmatprep.subr.mxu0 0.0
      %1199 = vmatpush1.msra.mxu0 0.0
      %1200 = vmatprep.mubr.f32.mxu0 0.0
      %1201 = vmatmul.mubr.f32.gmra.mrb[0].mxu0 %v505
      %v1202 = vpop.f32.mrb[0].mxu0
      %v1203 = vadd.f32 0.0, %v1202
      %v1204 = vpop.f32.mrb[0].mxu0
      %1205 = vmatprep.mubr.f32.mxu0 0.0
      %1206 = vmatmul.mubr.f32.gmra.mrb[0].mxu0 %v508
      %v1207 = vpop.f32.mrb[0].mxu0
      %v1208 = vadd.f32 0.0, %v1207
      %v1209 = vpop.f32.mrb[0].mxu0
      %1210 = vdwg.mxu0
      %1211 = vmatprep.subr.mxu0 0.0
      %1212 = vmatpush1.msra.mxu0 %v486
      %1213 = vmatprep.subr.mxu0 0.0
      %1214 = vmatpush1.msra.mxu0 %v491
      %1215 = vmatprep.subr.mxu0 0.0
      %1216 = vmatpush1.msra.mxu0 0.0
      %1217 = vmatprep.subr.mxu0 0.0
      %1218 = vmatpush1.msra.mxu0 0.0
      %1219 = vmatprep.subr.mxu0 0.0
      %1220 = vmatpush1.msra.mxu0 0.0
      %1221 = vmatprep.subr.mxu0 0.0
      %1222 = vmatpush1.msra.mxu0 0.0
      %1223 = vmatprep.subr.mxu0 0.0
      %1224 = vmatpush1.msra.mxu0 0.0
      %1225 = vmatprep.subr.mxu0 0.0
      %1226 = vmatpush1.msra.mxu0 0.0
      %1227 = vmatprep.subr.mxu0 0.0
      %1228 = vmatpush1.msra.mxu0 0.0
      %1229 = vmatprep.subr.mxu0 0.0
      %1230 = vmatpush1.msra.mxu0 0.0
      %1231 = vmatprep.subr.mxu0 0.0
      %1232 = vmatpush1.msra.mxu0 0.0
      %1233 = vmatprep.subr.mxu0 0.0
      %1234 = vmatpush1.msra.mxu0 0.0
      %1235 = vmatprep.subr.mxu0 0.0
      %1236 = vmatpush1.msra.mxu0 0.0
      %1237 = vmatprep.subr.mxu0 0.0
      %1238 = vmatpush1.msra.mxu0 0.0
      %1239 = vmatprep.subr.mxu0 0.0
      %1240 = vmatpush1.msra.mxu0 0.0
      %1241 = vmatprep.subr.mxu0 0.0
      %1242 = vmatpush1.msra.mxu0 0.0
      %1243 = vmatprep.subr.mxu0 0.0
      %1244 = vmatpush1.msra.mxu0 0.0
      %1245 = vmatprep.subr.mxu0 0.0
      %1246 = vmatpush1.msra.mxu0 0.0
      %1247 = vmatprep.subr.mxu0 0.0
      %1248 = vmatpush1.msra.mxu0 0.0
      %1249 = vmatprep.subr.mxu0 0.0
      %1250 = vmatpush1.msra.mxu0 0.0
      %1251 = vmatprep.subr.mxu0 0.0
      %1252 = vmatpush1.msra.mxu0 0.0
      %1253 = vmatprep.subr.mxu0 0.0
      %1254 = vmatpush1.msra.mxu0 0.0
      %1255 = vmatprep.subr.mxu0 0.0
      %1256 = vmatpush1.msra.mxu0 0.0
      %1257 = vmatprep.subr.mxu0 0.0
      %1258 = vmatpush1.msra.mxu0 0.0
      %1259 = vmatprep.subr.mxu0 0.0
      %1260 = vmatpush1.msra.mxu0 0.0
      %1261 = vmatprep.subr.mxu0 0.0
      %1262 = vmatpush1.msra.mxu0 0.0
      %1263 = vmatprep.subr.mxu0 0.0
      %1264 = vmatpush1.msra.mxu0 0.0
      %1265 = vmatprep.subr.mxu0 0.0
      %1266 = vmatpush1.msra.mxu0 0.0
      %1267 = vmatprep.subr.mxu0 0.0
      %1268 = vmatpush1.msra.mxu0 0.0
      %1269 = vmatprep.subr.mxu0 0.0
      %1270 = vmatpush1.msra.mxu0 0.0
      %1271 = vmatprep.subr.mxu0 0.0
      %1272 = vmatpush1.msra.mxu0 0.0
      %1273 = vmatprep.subr.mxu0 0.0
      %1274 = vmatpush1.msra.mxu0 0.0
      %1275 = vmatprep.mubr.f32.mxu0 0.0
      %1276 = vmatmul.mubr.f32.gmra.mrb[0].mxu0 %v586
      %v1277 = vpop.f32.mrb[0].mxu0
      %v1278 = vadd.f32 0.0, %v1277
      %v1279 = vpop.f32.mrb[0].mxu0
      %1280 = vmatprep.mubr.f32.mxu0 0.0
      %1281 = vmatmul.mubr.f32.gmra.mrb[0].mxu0 %v589
      %v1282 = vpop.f32.mrb[0].mxu0
      %v1283 = vadd.f32 0.0, %v1282
      %v1284 = vpop.f32.mrb[0].mxu0
      %1285 = vdwg.mxu0
      %1286 = vmatprep.subr.mxu0 0.0
      %1287 = vmatpush1.msra.mxu0 %v381
      %1288 = vmatprep.subr.mxu0 0.0
      %1289 = vmatpush1.msra.mxu0 %v386
      %1290 = vmatprep.subr.mxu0 0.0
      %1291 = vmatpush1.msra.mxu0 0.0
      %1292 = vmatprep.subr.mxu0 0.0
      %1293 = vmatpush1.msra.mxu0 0.0
      %1294 = vmatprep.subr.mxu0 0.0
      %1295 = vmatpush1.msra.mxu0 0.0
      %1296 = vmatprep.subr.mxu0 0.0
      %1297 = vmatpush1.msra.mxu0 0.0
      %1298 = vmatprep.subr.mxu0 0.0
      %1299 = vmatpush1.msra.mxu0 0.0
      %1300 = vmatprep.subr.mxu0 0.0
      %1301 = vmatpush1.msra.mxu0 0.0
      %1302 = vmatprep.subr.mxu0 0.0
      %1303 = vmatpush1.msra.mxu0 0.0
      %1304 = vmatprep.subr.mxu0 0.0
      %1305 = vmatpush1.msra.mxu0 0.0
      %1306 = vmatprep.subr.mxu0 0.0
      %1307 = vmatpush1.msra.mxu0 0.0
      %1308 = vmatprep.subr.mxu0 0.0
      %1309 = vmatpush1.msra.mxu0 0.0
      %1310 = vmatprep.subr.mxu0 0.0
      %1311 = vmatpush1.msra.mxu0 0.0
      %1312 = vmatprep.subr.mxu0 0.0
      %1313 = vmatpush1.msra.mxu0 0.0
      %1314 = vmatprep.subr.mxu0 0.0
      %1315 = vmatpush1.msra.mxu0 0.0
      %1316 = vmatprep.subr.mxu0 0.0
      %1317 = vmatpush1.msra.mxu0 0.0
      %1318 = vmatprep.subr.mxu0 0.0
      %1319 = vmatpush1.msra.mxu0 0.0
      %1320 = vmatprep.subr.mxu0 0.0
      %1321 = vmatpush1.msra.mxu0 0.0
      %1322 = vmatprep.subr.mxu0 0.0
      %1323 = vmatpush1.msra.mxu0 0.0
      %1324 = vmatprep.subr.mxu0 0.0
      %1325 = vmatpush1.msra.mxu0 0.0
      %1326 = vmatprep.subr.mxu0 0.0
      %1327 = vmatpush1.msra.mxu0 0.0
      %1328 = vmatprep.subr.mxu0 0.0
      %1329 = vmatpush1.msra.mxu0 0.0
      %1330 = vmatprep.subr.mxu0 0.0
      %1331 = vmatpush1.msra.mxu0 0.0
      %1332 = vmatprep.subr.mxu0 0.0
      %1333 = vmatpush1.msra.mxu0 0.0
      %1334 = vmatprep.subr.mxu0 0.0
      %1335 = vmatpush1.msra.mxu0 0.0
      %1336 = vmatprep.subr.mxu0 0.0
      %1337 = vmatpush1.msra.mxu0 0.0
      %1338 = vmatprep.subr.mxu0 0.0
      %1339 = vmatpush1.msra.mxu0 0.0
      %1340 = vmatprep.subr.mxu0 0.0
      %1341 = vmatpush1.msra.mxu0 0.0
      %1342 = vmatprep.subr.mxu0 0.0
      %1343 = vmatpush1.msra.mxu0 0.0
      %1344 = vmatprep.subr.mxu0 0.0
      %1345 = vmatpush1.msra.mxu0 0.0
      %1346 = vmatprep.subr.mxu0 0.0
      %1347 = vmatpush1.msra.mxu0 0.0
      %1348 = vmatprep.subr.mxu0 0.0
      %1349 = vmatpush1.msra.mxu0 0.0
      %1350 = vmatprep.mubr.f32.mxu0 0.0
      %1351 = vmatmul.mubr.f32.gmra.mrb[0].mxu0 %v586
      %v1352 = vpop.f32.mrb[0].mxu0
      %v1353 = vadd.f32 0.0, %v1352
      %v1354 = vpop.f32.mrb[0].mxu0
      %1355 = vmatprep.mubr.f32.mxu0 0.0
      %1356 = vmatmul.mubr.f32.gmra.mrb[0].mxu0 %v589
      %v1357 = vpop.f32.mrb[0].mxu0
      %v1358 = vadd.f32 0.0, %v1357
      %v1359 = vpop.f32.mrb[0].mxu0
      %1360 = vdwg.mxu0
      %v1361 = vsub.f32 %v1203, %v1278
      %v1362 = vsub.f32 %v1208, %v1283
      %1363 = vmatprep.subr.mxu0 0.0
      %1364 = vmatpush1.msra.mxu0 %v486
      %1365 = vmatprep.subr.mxu0 0.0
      %1366 = vmatpush1.msra.mxu0 %v491
      %1367 = vmatprep.subr.mxu0 0.0
      %1368 = vmatpush1.msra.mxu0 0.0
      %1369 = vmatprep.subr.mxu0 0.0
      %1370 = vmatpush1.msra.mxu0 0.0
      %1371 = vmatprep.subr.mxu0 0.0
      %1372 = vmatpush1.msra.mxu0 0.0
      %1373 = vmatprep.subr.mxu0 0.0
      %1374 = vmatpush1.msra.mxu0 0.0
      %1375 = vmatprep.subr.mxu0 0.0
      %1376 = vmatpush1.msra.mxu0 0.0
      %1377 = vmatprep.subr.mxu0 0.0
      %1378 = vmatpush1.msra.mxu0 0.0
      %1379 = vmatprep.subr.mxu0 0.0
      %1380 = vmatpush1.msra.mxu0 0.0
      %1381 = vmatprep.subr.mxu0 0.0
      %1382 = vmatpush1.msra.mxu0 0.0
      %1383 = vmatprep.subr.mxu0 0.0
      %1384 = vmatpush1.msra.mxu0 0.0
      %1385 = vmatprep.subr.mxu0 0.0
      %1386 = vmatpush1.msra.mxu0 0.0
      %1387 = vmatprep.subr.mxu0 0.0
      %1388 = vmatpush1.msra.mxu0 0.0
      %1389 = vmatprep.subr.mxu0 0.0
      %1390 = vmatpush1.msra.mxu0 0.0
      %1391 = vmatprep.subr.mxu0 0.0
      %1392 = vmatpush1.msra.mxu0 0.0
      %1393 = vmatprep.subr.mxu0 0.0
      %1394 = vmatpush1.msra.mxu0 0.0
      %1395 = vmatprep.subr.mxu0 0.0
      %1396 = vmatpush1.msra.mxu0 0.0
      %1397 = vmatprep.subr.mxu0 0.0
      %1398 = vmatpush1.msra.mxu0 0.0
      %1399 = vmatprep.subr.mxu0 0.0
      %1400 = vmatpush1.msra.mxu0 0.0
      %1401 = vmatprep.subr.mxu0 0.0
      %1402 = vmatpush1.msra.mxu0 0.0
      %1403 = vmatprep.subr.mxu0 0.0
      %1404 = vmatpush1.msra.mxu0 0.0
      %1405 = vmatprep.subr.mxu0 0.0
      %1406 = vmatpush1.msra.mxu0 0.0
      %1407 = vmatprep.subr.mxu0 0.0
      %1408 = vmatpush1.msra.mxu0 0.0
      %1409 = vmatprep.subr.mxu0 0.0
      %1410 = vmatpush1.msra.mxu0 0.0
      %1411 = vmatprep.subr.mxu0 0.0
      %1412 = vmatpush1.msra.mxu0 0.0
      %1413 = vmatprep.subr.mxu0 0.0
      %1414 = vmatpush1.msra.mxu0 0.0
      %1415 = vmatprep.subr.mxu0 0.0
      %1416 = vmatpush1.msra.mxu0 0.0
      %1417 = vmatprep.subr.mxu0 0.0
      %1418 = vmatpush1.msra.mxu0 0.0
      %1419 = vmatprep.subr.mxu0 0.0
      %1420 = vmatpush1.msra.mxu0 0.0
      %1421 = vmatprep.subr.mxu0 0.0
      %1422 = vmatpush1.msra.mxu0 0.0
      %1423 = vmatprep.subr.mxu0 0.0
      %1424 = vmatpush1.msra.mxu0 0.0
      %1425 = vmatprep.subr.mxu0 0.0
      %1426 = vmatpush1.msra.mxu0 0.0
      %1427 = vmatprep.mubr.f32.mxu0 0.0
      %1428 = vmatmul.mubr.f32.gmra.mrb[0].mxu0 %v505
      %v1429 = vpop.f32.mrb[0].mxu0
      %v1430 = vadd.f32 %v1353, %v1429
      %v1431 = vpop.f32.mrb[0].mxu0
      %1432 = vmatprep.mubr.f32.mxu0 0.0
      %1433 = vmatmul.mubr.f32.gmra.mrb[0].mxu0 %v508
      %v1434 = vpop.f32.mrb[0].mxu0
      %v1435 = vadd.f32 %v1358, %v1434
      %v1436 = vpop.f32.mrb[0].mxu0
      %1437 = vdwg.mxu0
      %v1438 = vmul.f32 %v1361, %v1361
      %v1439 = vmul.f32 %v1362, %v1362
      %v1440 = vadd.f32 %v1134, %v1438
      %v1441 = vadd.f32 %v1135, %v1439
      %v1442 = vmul.f32 %v1430, %v1430
      %v1443 = vmul.f32 %v1435, %v1435
      %v1444 = vadd.f32 %v1440, %v1442
      %v1445 = vadd.f32 %v1441, %v1443
      %1446 = vmatprep.subr.mxu0 0.0
      %1447 = vmatpush1.msra.mxu0 %v391
      %1448 = vmatprep.subr.mxu0 0.0
      %1449 = vmatpush1.msra.mxu0 %v396
      %1450 = vmatprep.subr.mxu0 0.0
      %1451 = vmatpush1.msra.mxu0 0.0
      %1452 = vmatprep.subr.mxu0 0.0
      %1453 = vmatpush1.msra.mxu0 0.0
      %1454 = vmatprep.subr.mxu0 0.0
      %1455 = vmatpush1.msra.mxu0 0.0
      %1456 = vmatprep.subr.mxu0 0.0
      %1457 = vmatpush1.msra.mxu0 0.0
      %1458 = vmatprep.subr.mxu0 0.0
      %1459 = vmatpush1.msra.mxu0 0.0
      %1460 = vmatprep.subr.mxu0 0.0
      %1461 = vmatpush1.msra.mxu0 0.0
      %1462 = vmatprep.subr.mxu0 0.0
      %1463 = vmatpush1.msra.mxu0 0.0
      %1464 = vmatprep.subr.mxu0 0.0
      %1465 = vmatpush1.msra.mxu0 0.0
      %1466 = vmatprep.subr.mxu0 0.0
      %1467 = vmatpush1.msra.mxu0 0.0
      %1468 = vmatprep.subr.mxu0 0.0
      %1469 = vmatpush1.msra.mxu0 0.0
      %1470 = vmatprep.subr.mxu0 0.0
      %1471 = vmatpush1.msra.mxu0 0.0
      %1472 = vmatprep.subr.mxu0 0.0
      %1473 = vmatpush1.msra.mxu0 0.0
      %1474 = vmatprep.subr.mxu0 0.0
      %1475 = vmatpush1.msra.mxu0 0.0
      %1476 = vmatprep.subr.mxu0 0.0
      %1477 = vmatpush1.msra.mxu0 0.0
      %1478 = vmatprep.subr.mxu0 0.0
      %1479 = vmatpush1.msra.mxu0 0.0
      %1480 = vmatprep.subr.mxu0 0.0
      %1481 = vmatpush1.msra.mxu0 0.0
      %1482 = vmatprep.subr.mxu0 0.0
      %1483 = vmatpush1.msra.mxu0 0.0
      %1484 = vmatprep.subr.mxu0 0.0
      %1485 = vmatpush1.msra.mxu0 0.0
      %1486 = vmatprep.subr.mxu0 0.0
      %1487 = vmatpush1.msra.mxu0 0.0
      %1488 = vmatprep.subr.mxu0 0.0
      %1489 = vmatpush1.msra.mxu0 0.0
      %1490 = vmatprep.subr.mxu0 0.0
      %1491 = vmatpush1.msra.mxu0 0.0
      %1492 = vmatprep.subr.mxu0 0.0
      %1493 = vmatpush1.msra.mxu0 0.0
      %1494 = vmatprep.subr.mxu0 0.0
      %1495 = vmatpush1.msra.mxu0 0.0
      %1496 = vmatprep.subr.mxu0 0.0
      %1497 = vmatpush1.msra.mxu0 0.0
      %1498 = vmatprep.subr.mxu0 0.0
      %1499 = vmatpush1.msra.mxu0 0.0
      %1500 = vmatprep.subr.mxu0 0.0
      %1501 = vmatpush1.msra.mxu0 0.0
      %1502 = vmatprep.subr.mxu0 0.0
      %1503 = vmatpush1.msra.mxu0 0.0
      %1504 = vmatprep.subr.mxu0 0.0
      %1505 = vmatpush1.msra.mxu0 0.0
      %1506 = vmatprep.subr.mxu0 0.0
      %1507 = vmatpush1.msra.mxu0 0.0
      %1508 = vmatprep.subr.mxu0 0.0
      %1509 = vmatpush1.msra.mxu0 0.0
      %1510 = vmatprep.mubr.f32.mxu0 0.0
      %1511 = vmatmul.mubr.f32.gmra.mrb[0].mxu0 %v505
      %v1512 = vpop.f32.mrb[0].mxu0
      %v1513 = vadd.f32 0.0, %v1512
      %v1514 = vpop.f32.mrb[0].mxu0
      %1515 = vmatprep.mubr.f32.mxu0 0.0
      %1516 = vmatmul.mubr.f32.gmra.mrb[0].mxu0 %v508
      %v1517 = vpop.f32.mrb[0].mxu0
      %v1518 = vadd.f32 0.0, %v1517
      %v1519 = vpop.f32.mrb[0].mxu0
      %1520 = vdwg.mxu0
      %1521 = vmatprep.subr.mxu0 0.0
      %1522 = vmatpush1.msra.mxu0 %v496
      %1523 = vmatprep.subr.mxu0 0.0
      %1524 = vmatpush1.msra.mxu0 %v501
      %1525 = vmatprep.subr.mxu0 0.0
      %1526 = vmatpush1.msra.mxu0 0.0
      %1527 = vmatprep.subr.mxu0 0.0
      %1528 = vmatpush1.msra.mxu0 0.0
      %1529 = vmatprep.subr.mxu0 0.0
      %1530 = vmatpush1.msra.mxu0 0.0
      %1531 = vmatprep.subr.mxu0 0.0
      %1532 = vmatpush1.msra.mxu0 0.0
      %1533 = vmatprep.subr.mxu0 0.0
      %1534 = vmatpush1.msra.mxu0 0.0
      %1535 = vmatprep.subr.mxu0 0.0
      %1536 = vmatpush1.msra.mxu0 0.0
      %1537 = vmatprep.subr.mxu0 0.0
      %1538 = vmatpush1.msra.mxu0 0.0
      %1539 = vmatprep.subr.mxu0 0.0
      %1540 = vmatpush1.msra.mxu0 0.0
      %1541 = vmatprep.subr.mxu0 0.0
      %1542 = vmatpush1.msra.mxu0 0.0
      %1543 = vmatprep.subr.mxu0 0.0
      %1544 = vmatpush1.msra.mxu0 0.0
      %1545 = vmatprep.subr.mxu0 0.0
      %1546 = vmatpush1.msra.mxu0 0.0
      %1547 = vmatprep.subr.mxu0 0.0
      %1548 = vmatpush1.msra.mxu0 0.0
      %1549 = vmatprep.subr.mxu0 0.0
      %1550 = vmatpush1.msra.mxu0 0.0
      %1551 = vmatprep.subr.mxu0 0.0
      %1552 = vmatpush1.msra.mxu0 0.0
      %1553 = vmatprep.subr.mxu0 0.0
      %1554 = vmatpush1.msra.mxu0 0.0
      %1555 = vmatprep.subr.mxu0 0.0
      %1556 = vmatpush1.msra.mxu0 0.0
      %1557 = vmatprep.subr.mxu0 0.0
      %1558 = vmatpush1.msra.mxu0 0.0
      %1559 = vmatprep.subr.mxu0 0.0
      %1560 = vmatpush1.msra.mxu0 0.0
      %1561 = vmatprep.subr.mxu0 0.0
      %1562 = vmatpush1.msra.mxu0 0.0
      %1563 = vmatprep.subr.mxu0 0.0
      %1564 = vmatpush1.msra.mxu0 0.0
      %1565 = vmatprep.subr.mxu0 0.0
      %1566 = vmatpush1.msra.mxu0 0.0
      %1567 = vmatprep.subr.mxu0 0.0
      %1568 = vmatpush1.msra.mxu0 0.0
      %1569 = vmatprep.subr.mxu0 0.0
      %1570 = vmatpush1.msra.mxu0 0.0
      %1571 = vmatprep.subr.mxu0 0.0
      %1572 = vmatpush1.msra.mxu0 0.0
      %1573 = vmatprep.subr.mxu0 0.0
      %1574 = vmatpush1.msra.mxu0 0.0
      %1575 = vmatprep.subr.mxu0 0.0
      %1576 = vmatpush1.msra.mxu0 0.0
      %1577 = vmatprep.subr.mxu0 0.0
      %1578 = vmatpush1.msra.mxu0 0.0
      %1579 = vmatprep.subr.mxu0 0.0
      %1580 = vmatpush1.msra.mxu0 0.0
      %1581 = vmatprep.subr.mxu0 0.0
      %1582 = vmatpush1.msra.mxu0 0.0
      %1583 = vmatprep.subr.mxu0 0.0
      %1584 = vmatpush1.msra.mxu0 0.0
      %1585 = vmatprep.mubr.f32.mxu0 0.0
      %1586 = vmatmul.mubr.f32.gmra.mrb[0].mxu0 %v586
      %v1587 = vpop.f32.mrb[0].mxu0
      %v1588 = vadd.f32 0.0, %v1587
      %v1589 = vpop.f32.mrb[0].mxu0
      %1590 = vmatprep.mubr.f32.mxu0 0.0
      %1591 = vmatmul.mubr.f32.gmra.mrb[0].mxu0 %v589
      %v1592 = vpop.f32.mrb[0].mxu0
      %v1593 = vadd.f32 0.0, %v1592
      %v1594 = vpop.f32.mrb[0].mxu0
      %1595 = vdwg.mxu0
      %1596 = vmatprep.subr.mxu0 0.0
      %1597 = vmatpush1.msra.mxu0 %v391
      %1598 = vmatprep.subr.mxu0 0.0
      %1599 = vmatpush1.msra.mxu0 %v396
      %1600 = vmatprep.subr.mxu0 0.0
      %1601 = vmatpush1.msra.mxu0 0.0
      %1602 = vmatprep.subr.mxu0 0.0
      %1603 = vmatpush1.msra.mxu0 0.0
      %1604 = vmatprep.subr.mxu0 0.0
      %1605 = vmatpush1.msra.mxu0 0.0
      %1606 = vmatprep.subr.mxu0 0.0
      %1607 = vmatpush1.msra.mxu0 0.0
      %1608 = vmatprep.subr.mxu0 0.0
      %1609 = vmatpush1.msra.mxu0 0.0
      %1610 = vmatprep.subr.mxu0 0.0
      %1611 = vmatpush1.msra.mxu0 0.0
      %1612 = vmatprep.subr.mxu0 0.0
      %1613 = vmatpush1.msra.mxu0 0.0
      %1614 = vmatprep.subr.mxu0 0.0
      %1615 = vmatpush1.msra.mxu0 0.0
      %1616 = vmatprep.subr.mxu0 0.0
      %1617 = vmatpush1.msra.mxu0 0.0
      %1618 = vmatprep.subr.mxu0 0.0
      %1619 = vmatpush1.msra.mxu0 0.0
      %1620 = vmatprep.subr.mxu0 0.0
      %1621 = vmatpush1.msra.mxu0 0.0
      %1622 = vmatprep.subr.mxu0 0.0
      %1623 = vmatpush1.msra.mxu0 0.0
      %1624 = vmatprep.subr.mxu0 0.0
      %1625 = vmatpush1.msra.mxu0 0.0
      %1626 = vmatprep.subr.mxu0 0.0
      %1627 = vmatpush1.msra.mxu0 0.0
      %1628 = vmatprep.subr.mxu0 0.0
      %1629 = vmatpush1.msra.mxu0 0.0
      %1630 = vmatprep.subr.mxu0 0.0
      %1631 = vmatpush1.msra.mxu0 0.0
      %1632 = vmatprep.subr.mxu0 0.0
      %1633 = vmatpush1.msra.mxu0 0.0
      %1634 = vmatprep.subr.mxu0 0.0
      %1635 = vmatpush1.msra.mxu0 0.0
      %1636 = vmatprep.subr.mxu0 0.0
      %1637 = vmatpush1.msra.mxu0 0.0
      %1638 = vmatprep.subr.mxu0 0.0
      %1639 = vmatpush1.msra.mxu0 0.0
      %1640 = vmatprep.subr.mxu0 0.0
      %1641 = vmatpush1.msra.mxu0 0.0
      %1642 = vmatprep.subr.mxu0 0.0
      %1643 = vmatpush1.msra.mxu0 0.0
      %1644 = vmatprep.subr.mxu0 0.0
      %1645 = vmatpush1.msra.mxu0 0.0
      %1646 = vmatprep.subr.mxu0 0.0
      %1647 = vmatpush1.msra.mxu0 0.0
      %1648 = vmatprep.subr.mxu0 0.0
      %1649 = vmatpush1.msra.mxu0 0.0
      %1650 = vmatprep.subr.mxu0 0.0
      %1651 = vmatpush1.msra.mxu0 0.0
      %1652 = vmatprep.subr.mxu0 0.0
      %1653 = vmatpush1.msra.mxu0 0.0
      %1654 = vmatprep.subr.mxu0 0.0
      %1655 = vmatpush1.msra.mxu0 0.0
      %1656 = vmatprep.subr.mxu0 0.0
      %1657 = vmatpush1.msra.mxu0 0.0
      %1658 = vmatprep.subr.mxu0 0.0
      %1659 = vmatpush1.msra.mxu0 0.0
      %1660 = vmatprep.mubr.f32.mxu0 0.0
      %1661 = vmatmul.mubr.f32.gmra.mrb[0].mxu0 %v586
      %v1662 = vpop.f32.mrb[0].mxu0
      %v1663 = vadd.f32 0.0, %v1662
      %v1664 = vpop.f32.mrb[0].mxu0
      %1665 = vmatprep.mubr.f32.mxu0 0.0
      %1666 = vmatmul.mubr.f32.gmra.mrb[0].mxu0 %v589
      %v1667 = vpop.f32.mrb[0].mxu0
      %v1668 = vadd.f32 0.0, %v1667
      %v1669 = vpop.f32.mrb[0].mxu0
      %1670 = vdwg.mxu0
      %v1671 = vsub.f32 %v1513, %v1588
      %v1672 = vsub.f32 %v1518, %v1593
      %1673 = vmatprep.subr.mxu0 0.0
      %1674 = vmatpush1.msra.mxu0 %v496
      %1675 = vmatprep.subr.mxu0 0.0
      %1676 = vmatpush1.msra.mxu0 %v501
      %1677 = vmatprep.subr.mxu0 0.0
      %1678 = vmatpush1.msra.mxu0 0.0
      %1679 = vmatprep.subr.mxu0 0.0
      %1680 = vmatpush1.msra.mxu0 0.0
      %1681 = vmatprep.subr.mxu0 0.0
      %1682 = vmatpush1.msra.mxu0 0.0
      %1683 = vmatprep.subr.mxu0 0.0
      %1684 = vmatpush1.msra.mxu0 0.0
      %1685 = vmatprep.subr.mxu0 0.0
      %1686 = vmatpush1.msra.mxu0 0.0
      %1687 = vmatprep.subr.mxu0 0.0
      %1688 = vmatpush1.msra.mxu0 0.0
      %1689 = vmatprep.subr.mxu0 0.0
      %1690 = vmatpush1.msra.mxu0 0.0
      %1691 = vmatprep.subr.mxu0 0.0
      %1692 = vmatpush1.msra.mxu0 0.0
      %1693 = vmatprep.subr.mxu0 0.0
      %1694 = vmatpush1.msra.mxu0 0.0
      %1695 = vmatprep.subr.mxu0 0.0
      %1696 = vmatpush1.msra.mxu0 0.0
      %1697 = vmatprep.subr.mxu0 0.0
      %1698 = vmatpush1.msra.mxu0 0.0
      %1699 = vmatprep.subr.mxu0 0.0
      %1700 = vmatpush1.msra.mxu0 0.0
      %1701 = vmatprep.subr.mxu0 0.0
      %1702 = vmatpush1.msra.mxu0 0.0
      %1703 = vmatprep.subr.mxu0 0.0
      %1704 = vmatpush1.msra.mxu0 0.0
      %1705 = vmatprep.subr.mxu0 0.0
      %1706 = vmatpush1.msra.mxu0 0.0
      %1707 = vmatprep.subr.mxu0 0.0
      %1708 = vmatpush1.msra.mxu0 0.0
      %1709 = vmatprep.subr.mxu0 0.0
      %1710 = vmatpush1.msra.mxu0 0.0
      %1711 = vmatprep.subr.mxu0 0.0
      %1712 = vmatpush1.msra.mxu0 0.0
      %1713 = vmatprep.subr.mxu0 0.0
      %1714 = vmatpush1.msra.mxu0 0.0
      %1715 = vmatprep.subr.mxu0 0.0
      %1716 = vmatpush1.msra.mxu0 0.0
      %1717 = vmatprep.subr.mxu0 0.0
      %1718 = vmatpush1.msra.mxu0 0.0
      %1719 = vmatprep.subr.mxu0 0.0
      %1720 = vmatpush1.msra.mxu0 0.0
      %1721 = vmatprep.subr.mxu0 0.0
      %1722 = vmatpush1.msra.mxu0 0.0
      %1723 = vmatprep.subr.mxu0 0.0
      %1724 = vmatpush1.msra.mxu0 0.0
      %1725 = vmatprep.subr.mxu0 0.0
      %1726 = vmatpush1.msra.mxu0 0.0
      %1727 = vmatprep.subr.mxu0 0.0
      %1728 = vmatpush1.msra.mxu0 0.0
      %1729 = vmatprep.subr.mxu0 0.0
      %1730 = vmatpush1.msra.mxu0 0.0
      %1731 = vmatprep.subr.mxu0 0.0
      %1732 = vmatpush1.msra.mxu0 0.0
      %1733 = vmatprep.subr.mxu0 0.0
      %1734 = vmatpush1.msra.mxu0 0.0
      %1735 = vmatprep.subr.mxu0 0.0
      %1736 = vmatpush1.msra.mxu0 0.0
      %1737 = vmatprep.mubr.f32.mxu0 0.0
      %1738 = vmatmul.mubr.f32.gmra.mrb[0].mxu0 %v505
      %v1739 = vpop.f32.mrb[0].mxu0
      %v1740 = vadd.f32 %v1663, %v1739
      %v1741 = vpop.f32.mrb[0].mxu0
      %1742 = vmatprep.mubr.f32.mxu0 0.0
      %1743 = vmatmul.mubr.f32.gmra.mrb[0].mxu0 %v508
      %v1744 = vpop.f32.mrb[0].mxu0
      %v1745 = vadd.f32 %v1668, %v1744
      %v1746 = vpop.f32.mrb[0].mxu0
      %1747 = vdwg.mxu0
      %v1748 = vmul.f32 %v1671, %v1671
      %v1749 = vmul.f32 %v1672, %v1672
      %v1750 = vadd.f32 %v1444, %v1748
      %v1751 = vadd.f32 %v1445, %v1749
      %v1752 = vmul.f32 %v1740, %v1740
      %v1753 = vmul.f32 %v1745, %v1745
      %v1754 = vadd.f32 %v1750, %v1752
      %v1755 = vadd.f32 %v1751, %v1753
      %v1756 = vld [vmem:[%s245] sm:$0xff]
      %v1757 = vld [vmem:[%s245 + $0x8] sm:$0xff]
      %v1758 = vadd.f32 %v1756, %v1754
      %v1759 = vadd.f32 %v1757, %v1755
      %vm1760 = vcmask 72704
      %1761 = vst.msk [vmem:[%s245] sm:$0xff] %vm1760, %v1758
      %1762 = vst.msk [vmem:[%s245 + $0x8] sm:$0xff] %vm1760, %v1759
      %p1763 = scmp.lt.s32.totalorder %s20, 1
      %s1764 = scalar_select %p1763, %s20, 1
      %s1765 = smul.addr %s1764, 2
      %s1766 = smul.addr %s1765, 8
      %s1767 = scalar_lea.vmem %s5, %s1766
      // Predicated region
      $region45: #{tpu_custom_call.1} parent=39 // pred_check
        %p1768 = pneg %p158
      $region46: #{tpu_custom_call.1} parent=39 // pred_check_branch
        %1770 = sbr.rel (%p1768) target = $region48
      $region47: #{tpu_custom_call.1} parent=39 // pred_region
        _
      $region48: #{tpu_custom_call.1} parent=39 // pred_fallthru
        _
    $region40: #{tpu_custom_call.1} parent=5 // pred_fallthru
      _
    %p1771 = scmp.le.s32.totalorder 2, %s11
    // Predicated region
    $region49: #{tpu_custom_call.1} parent=5 // pred_check
      %p1772 = pneg %p1771
    $region50: #{tpu_custom_call.1} parent=5 // pred_check_branch
      %1774 = sbr.rel (%p1772) target = $region52
    $region51: #{tpu_custom_call.1} parent=5 // pred_region
      %s1775 = ssub.s32 %s11, 2
      // Predicated region
      $region53: #{tpu_custom_call.1} parent=51 // pred_check
        %p1776 = pneg %p164
      $region54: #{tpu_custom_call.1} parent=51 // pred_check_branch
        %1778 = sbr.rel (%p1776) target = $region56
      $region55: #{tpu_custom_call.1} parent=51 // pred_region
        %p1779 = scmp.lt.s32.totalorder %s22, 1
        %s1780 = scalar_select %p1779, %s22, 1
        %s1781 = smul.addr %s1780, 2
        %s1782 = smul.addr %s1781, 8
        %s1783 = scalar_lea.vmem %s5, %s1782
      $region56: #{tpu_custom_call.1} parent=51 // pred_fallthru
        _
    $region52: #{tpu_custom_call.1} parent=5 // pred_fallthru
      _
  $region6: #{tpu_custom_call.1} parent=0 // loop_footer
    %s15 = sadd.s32 1, %s11
  $region7: #{tpu_custom_call.1} parent=0 // loop_footer_branch
    %10 = sbr.rel target = $region3
  $region8: #{tpu_custom_call.1} parent=0 // loop_exit
    _

</llo_original>
